<compile_context>
chip_gen: v5e
topology: v5e:2x2
jax: 0.10.0
libtpu: 0.0.40
codegen_flags: <defaults>
</compile_context>

<pallas_src>
import functools

import jax
import jax.numpy as jnp
from jax import lax
from jax.experimental import pallas as pl
from jax.experimental.pallas import tpu as pltpu


def _round_up(n, m):
  return ((n + m - 1) // m) * m


# ---------------------------------------------------------------------------
# Pallas kernel: embedding -> num_blocks message passing / position updates
# -> pooled lattice delta, in one VMEM-resident invocation.
# ---------------------------------------------------------------------------
def _gemsnet_kernel(
    scal_ref,     # SMEM (2*num_blocks,) f32: [wd_0, alpha_0, wd_1, alpha_1, ...]
    z_ref,        # (N, Z8)  bf16 atom latent features (zero-padded to mult of 8)
    x_ref,        # (N, 3)   f32  fractional coordinates (x_thild)
    cell_ref,     # (N, 9)   f32  per-atom lattice matrix, row-major
    cinv_ref,     # (N, 9)   f32  per-atom inverse lattice matrix, row-major
    bcol_ref,     # (N, 1)   int32 crystal index per atom (column layout)
    brow_ref,     # (1, N)   int32 crystal index per atom (row layout)
    kth2_ref,     # (N, 1)   f32  squared knn radius per atom (initial geometry)
    wemb_ref,     # (Z8, F8) bf16
    bemb_ref,     # (1, F8)  f32
    wqk_ref,      # (num_blocks, F8, F8) bf16   wq @ wk^T per block
    wvo_ref,      # (num_blocks, F8, F8) bf16   wv @ wo   per block
    wrho_ref,     # (F8, 9)  bf16
    brho_ref,     # (1, 9)   f32
    # outputs
    xtraj_ref,    # (num_blocks, N, 3) f32
    dlat_ref,     # (B, 9) f32 un-symmetrized lattice delta (finished in wrapper)
    *,
    num_blocks: int,
    feat: int,
    num_crystals: int,
):
  f32 = jnp.float32
  bf16 = jnp.bfloat16
  n = x_ref.shape[0]

  cell = cell_ref[...]
  cinv = cinv_ref[...]
  ones_col = jnp.ones((n, 1), f32)

  def frac_to_cart(xf):           # (N,3) -> homogeneous (N,4): [cart | 1]
    c = (xf[:, 0:1] * cell[:, 0:3] + xf[:, 1:2] * cell[:, 3:6]
         + xf[:, 2:3] * cell[:, 6:9])
    return jnp.concatenate([c, ones_col], axis=1)

  def cart_to_frac(xc):           # (N,3) -> (N,3), per-atom inverse lattice
    return (xc[:, 0:1] * cinv[:, 0:3] + xc[:, 1:2] * cinv[:, 3:6]
            + xc[:, 2:3] * cinv[:, 6:9])

  def pair_sqdist(cp):            # (N,4) homogeneous -> (N,N), Gram matmul (MXU)
    # Kept in f32 (tiny K=4 matmul): bf16 products would suffer catastrophic
    # cancellation for nearby atoms.  Clamp >= 0 so rsqrt never sees negatives.
    g = lax.dot_general(cp, cp, (((1,), (1,)), ((), ())),
                        preferred_element_type=f32)        # cart.cart^T + 1
    r = (cp[:, 0:1] * cp[:, 0:1] + cp[:, 1:2] * cp[:, 1:2]
         + cp[:, 2:3] * cp[:, 2:3])                        # (N,1) row norms
    d2 = r + jnp.transpose(r) - 2.0 * (g - 1.0)
    return jnp.maximum(d2, 0.0)

  # Graph mask built in-kernel (no O(N^2) HBM->VMEM input): same crystal,
  # not self, within the host-precomputed knn radius of the initial geometry.
  b_col = bcol_ref[...]
  b_row = brow_ref[...]
  same = b_col == b_row
  ri = lax.broadcasted_iota(jnp.int32, (n, n), 0)
  ci = lax.broadcasted_iota(jnp.int32, (n, n), 1)
  not_self = ri != ci

  x0 = x_ref[...]
  cart0 = frac_to_cart(x0)         # reused by block 0 through the loop carry
  d2_0 = pair_sqdist(cart0)
  mask = jnp.where(same & not_self & (d2_0 <= kth2_ref[...]),
                   1.0, 0.0).astype(f32)

  # Atom embedding: bf16 operands, f32 MXU accumulation.
  h0 = jnp.tanh(
      jnp.dot(z_ref[...], wemb_ref[...], preferred_element_type=f32)
      + bemb_ref[...])

  inv_sqrt_f = 1.0 / (feat ** 0.5)   # scale uses the *logical* feature width

  def block(b, carry):
    x, cartp, d2, h = carry
    wd = scal_ref[2 * b]
    alpha = scal_ref[2 * b + 1]

    inv_d = lax.rsqrt(d2 + 1e-6)
    d = d2 * inv_d                               # ~ ||r_ij||

    hb = h.astype(bf16)
    qk = jnp.dot(hb, wqk_ref[b], preferred_element_type=f32)   # (N, F8)
    vo = jnp.dot(hb, wvo_ref[b], preferred_element_type=f32)   # (N, F8)

    # Attention-style edge scores with distance penalty:
    #   s = h (wq wk^T) h^T / sqrt(F) - wd * d
    # (rhs-minor contraction; Mosaic lowers this on the MXU transposed-rhs path)
    s = (lax.dot_general(qk.astype(bf16), hb, (((1,), (1,)), ((), ())),
                         preferred_element_type=f32) * inv_sqrt_f
         - wd * d)

    # One EUP tanh gives both gates: sigmoid(s) and tanh(s) (exact reciprocal).
    t = jnp.tanh(0.5 * s)
    sig = 0.5 * (t + 1.0)
    tnh = (2.0 * t) * pl.reciprocal(1.0 + t * t, approx=False)

    # Feature message passing (graph-masked, gated) - bf16 MXU operands.
    gate = (sig * mask).astype(bf16)
    h = h + jnp.tanh(jnp.dot(gate, vo.astype(bf16),
                             preferred_element_type=f32))

    # Equivariant position update: delta_i = sum_j w_ij (cart_j - cart_i).
    # The ones lane of cartp folds the row-sum of w into the same matmul.
    # Kept f32 (tiny (N,N)@(N,4)): avoids bf16 cancellation on the update.
    w = tnh * mask * (alpha * inv_d)
    agg = jnp.dot(w, cartp, preferred_element_type=f32)          # (N, 4)
    delta_cart = agg[:, 0:3] - agg[:, 3:4] * cartp[:, 0:3]
    x = x + cart_to_frac(delta_cart)
    # TODO(synk): no wrap of fractional coords into [0,1) and no periodic
    # minimum-image convention (GemsNetT internals not given in reference).
    xtraj_ref[b] = x

    cartp = frac_to_cart(x)        # geometry for the next block (carried)
    d2 = pair_sqdist(cartp)
    return (x, cartp, d2, h)

  unroll = True if num_blocks <= 4 else 2
  _, _, _, h_fin = lax.fori_loop(0, num_blocks, block,
                                 (x0, cart0, d2_0, h0), unroll=unroll)

  # Crystal pooling + lattice-delta head.  Symmetrization, gamma scaling and
  # the +cell are finished in plain XLA in the wrapper (tiny (B,9) tensor).
  iota_b = lax.broadcasted_iota(jnp.int32, (num_crystals, n), 0)
  pool = jnp.where(iota_b == b_row, 1.0, 0.0).astype(bf16)       # exact 0/1
  pooled = jnp.dot(pool, h_fin.astype(bf16),
                   preferred_element_type=jnp.float32)           # (B, F8)
  dlat_ref[...] = jnp.tanh(
      jnp.dot(pooled.astype(bf16), wrho_ref[...],
              preferred_element_type=jnp.float32)
      + brho_ref[...])


# ---------------------------------------------------------------------------
# Plain-JAX glue: graph radius, per-atom cell expansion, weight fusion/padding,
# pallas_call, lattice symmetrization.
# ---------------------------------------------------------------------------
def _inv3(m):
  """Analytic 3x3 inverse, batched over leading dims."""
  a, b, c = m[..., 0, 0], m[..., 0, 1], m[..., 0, 2]
  d, e, f = m[..., 1, 0], m[..., 1, 1], m[..., 1, 2]
  g, h, i = m[..., 2, 0], m[..., 2, 1], m[..., 2, 2]
  A = e * i - f * h
  B = -(d * i - f * g)
  C = d * h - e * g
  D = -(b * i - c * h)
  E = a * i - c * g
  F_ = -(a * h - b * g)
  G = b * f - c * e
  H = -(a * f - c * d)
  I = a * e - b * d
  det = a * A + b * B + c * C
  adj_t = jnp.stack([jnp.stack([A, D, G], -1),
                     jnp.stack([B, E, H], -1),
                     jnp.stack([C, F_, I], -1)], -2)
  return adj_t / det[..., None, None]


def _pad_last(a, target):
  pad = target - a.shape[-1]
  if pad <= 0:
    return a
  cfg = [(0, 0)] * (a.ndim - 1) + [(0, pad)]
  return jnp.pad(a, cfg)


def _pad_axis(a, axis, target):
  pad = target - a.shape[axis]
  if pad <= 0:
    return a
  cfg = [(0, 0)] * a.ndim
  cfg[axis] = (0, pad)
  return jnp.pad(a, cfg)


def _vmem_limit_bytes(n, f8, z8, num_blocks):
  """N-dependent VMEM budget, capped at ~78% of physical VMEM (v7x-safe)."""
  nn = n * n * 4
  est = (14 * nn                          # (N,N) f32 temporaries + carried d2
         + 10 * n * max(f8, 128) * 4      # h carry / per-block activations
         + num_blocks * 2 * f8 * f8 * 2   # per-block bf16 weights
         + n * (z8 + 64) * 4              # inputs
         + num_blocks * n * 16)           # x_traj
  est = 2 * est + (4 << 20)               # slack: spills / io buffering
  try:
    phys = pltpu.get_tpu_info().vmem_capacity_bytes
  except Exception:
    phys = 64 * 1024 * 1024               # conservative (v7x) fallback
  return int(min(max(est, 32 * 1024 * 1024), int(phys * 0.78)))


def gemsnet_denoiser_forward(params, cell, x_thild, z, num_atoms,
                             *, knn: int, num_blocks: int):
  """Returns (x_prime, x_traj, rho_prime) as in GemsNetDenoiser.forward."""
  B = cell.shape[0]
  N = x_thild.shape[0]
  Z = z.shape[1]
  F = params["wemb"].shape[1]
  F8 = _round_up(F, 8)    # contraction dims padded only to the f32 sublane tile
  Z8 = _round_up(Z, 8)

  cell = cell.astype(jnp.float32)
  x_thild = x_thild.astype(jnp.float32)

  batch_idx = jnp.repeat(jnp.arange(B, dtype=jnp.int32), num_atoms,
                         total_repeat_length=N)
  cell_rows = cell[batch_idx]                               # (N, 3, 3)
  cell_a = cell_rows.reshape(N, 9)
  cinv_a = _inv3(cell)[batch_idx].reshape(N, 9)

  # Squared knn radius from the initial (noisy) cartesian geometry.
  # Gram-form distances (no (N,N,3) diff tensor), lax.top_k (no full sort).
  # TODO(synk): true GemsNet uses periodic minimum-image neighbors.
  cart0 = jnp.einsum("nd,nde->ne", x_thild, cell_rows)
  r0 = jnp.sum(cart0 * cart0, axis=-1)
  d2_0 = jnp.maximum(r0[:, None] + r0[None, :] - 2.0 * (cart0 @ cart0.T), 0.0)
  same = batch_idx[:, None] == batch_idx[None, :]
  not_self = ~jnp.eye(N, dtype=bool)
  cand = jnp.where(same & not_self, d2_0, jnp.inf)
  k = min(knn, N)
  kth2 = -lax.top_k(-cand, k)[0][:, k - 1]
  kth2 = kth2 * (1.0 + 1e-6) + 1e-9     # slack: kernel recomputes d2 itself

  b_col = batch_idx.reshape(N, 1)
  b_row = batch_idx.reshape(1, N)
  kth2_col = kth2.reshape(N, 1).astype(jnp.float32)

  # --- weight preprocessing (constants, done once outside the kernel) -----
  bf16 = jnp.bfloat16
  wemb_p = _pad_axis(_pad_last(params["wemb"], F8), 0, Z8).astype(bf16)
  bemb_p = _pad_last(params["bemb"], F8).astype(jnp.float32)
  wqk = jnp.einsum("bij,bkj->bik", params["wq"], params["wk"])    # wq @ wk^T
  wvo = jnp.einsum("bij,bjk->bik", params["wv"], params["wo"])    # wv @ wo
  wqk_p = _pad_axis(_pad_last(wqk, F8), 1, F8).astype(bf16)
  wvo_p = _pad_axis(_pad_last(wvo, F8), 1, F8).astype(bf16)
  wrho_p = _pad_axis(params["wrho"], 0, F8).astype(bf16)          # (F8, 9)
  brho_p = params["brho"].astype(jnp.float32)
  z_p = _pad_last(z.astype(jnp.float32), Z8).astype(bf16)         # (N, Z8)

  scal = jnp.stack([params["wd"], params["alpha"]], axis=1
                   ).reshape(-1).astype(jnp.float32)              # (2*nb,)

  vmem = pl.BlockSpec(memory_space=pltpu.MemorySpace.VMEM)
  smem = pl.BlockSpec(memory_space=pltpu.MemorySpace.SMEM)

  kernel = functools.partial(_gemsnet_kernel, num_blocks=num_blocks,
                             feat=F, num_crystals=B)
  x_traj, dlat = pl.pallas_call(
      kernel,
      out_shape=(jax.ShapeDtypeStruct((num_blocks, N, 3), jnp.float32),
                 jax.ShapeDtypeStruct((B, 9), jnp.float32)),
      in_specs=[smem] + [vmem] * 13,
      out_specs=(vmem, vmem),
      compiler_params=pltpu.CompilerParams(
          vmem_limit_bytes=_vmem_limit_bytes(N, F8, Z8, num_blocks)),
  )(scal, z_p, x_thild, cell_a, cinv_a, b_col, b_row, kth2_col,
    wemb_p, bemb_p, wqk_p, wvo_p, wrho_p, brho_p)

  x_prime = x_traj[-1]
  dmat = dlat.reshape(B, 3, 3)
  rho_prime = cell + params["gamma"] * 0.5 * (dmat + jnp.swapaxes(dmat, -1, -2))
  return x_prime, x_traj, rho_prime


def init_params(key, *, z_dim: int, features: int, num_blocks: int):
  """Deterministic synthetic parameters (module shapes, no checkpoint)."""
  ks = jax.random.split(key, 6)
  s = 0.5 / (features ** 0.5)
  return {
      "wemb": jax.random.normal(ks[0], (z_dim, features), jnp.float32)
              * (1.0 / (z_dim ** 0.5)),
      "bemb": jnp.zeros((1, features), jnp.float32),
      "wq": jax.random.normal(ks[1], (num_blocks, features, features),
                              jnp.float32) * s,
      "wk": jax.random.normal(ks[2], (num_blocks, features, features),
                              jnp.float32) * s,
      "wv": jax.random.normal(ks[3], (num_blocks, features, features),
                              jnp.float32) * s,
      "wo": jax.random.normal(ks[4], (num_blocks, features, features),
                              jnp.float32) * s,
      "wrho": jax.random.normal(ks[5], (features, 9), jnp.float32) * s,
      "brho": jnp.zeros((1, 9), jnp.float32),
      "wd": jnp.full((num_blocks,), 0.2, jnp.float32),     # distance penalty
      "alpha": jnp.full((num_blocks,), 0.05, jnp.float32), # position step
      "gamma": jnp.float32(0.1),                           # lattice step
  }


if __name__ == "__main__":
  # Small shapes consistent with GemsNetDenoiser.forward:
  #   cell (B, 3, 3), x_thild (N, 3), z (N, Z), num_atoms (B,)
  B, N, Z, FEATURES, KNN, NUM_BLOCKS = 2, 8, 16, 32, 4, 2
  vector_fields = {"edges": ["knn"], "normalize": True}  # config only

  key = jax.random.PRNGKey(0)
  k1, k2, k3, kp = jax.random.split(key, 4)
  cell = jnp.eye(3, dtype=jnp.float32)[None] * 5.0 \
         + 0.1 * jax.random.normal(k1, (B, 3, 3), jnp.float32)
  x_thild = jax.random.uniform(k2, (N, 3), dtype=jnp.float32)
  z = jax.random.normal(k3, (N, Z), jnp.float32)
  num_atoms = jnp.array([4, 4], dtype=jnp.int32)

  params = init_params(kp, z_dim=Z, features=FEATURES, num_blocks=NUM_BLOCKS)

  x_prime, x_traj, rho_prime = gemsnet_denoiser_forward(
      params, cell, x_thild, z, num_atoms, knn=KNN, num_blocks=NUM_BLOCKS)
  jax.block_until_ready((x_prime, x_traj, rho_prime))

  assert x_prime.shape == (N, 3)
  assert x_traj.shape == (NUM_BLOCKS, N, 3)
  assert rho_prime.shape == (B, 3, 3)
  assert jnp.all(jnp.isfinite(x_prime))
  assert jnp.all(jnp.isfinite(x_traj))
  assert jnp.all(jnp.isfinite(rho_prime))
  print("KERNEL_OK")
</pallas_src>

<mosaic_0001>
module attributes {stable_mosaic.version = 11 : i64} {
  func.func @_gemsnet_kernel(%arg0: memref<4xf32, #tpu.memory_space<smem>>, %arg1: memref<8x16xbf16, #tpu.memory_space<vmem>>, %arg2: memref<8x3xf32, #tpu.memory_space<vmem>>, %arg3: memref<8x9xf32, #tpu.memory_space<vmem>>, %arg4: memref<8x9xf32, #tpu.memory_space<vmem>>, %arg5: memref<8x1xi32, #tpu.memory_space<vmem>>, %arg6: memref<1x8xi32, #tpu.memory_space<vmem>>, %arg7: memref<8x1xf32, #tpu.memory_space<vmem>>, %arg8: memref<16x32xbf16, #tpu.memory_space<vmem>>, %arg9: memref<1x32xf32, #tpu.memory_space<vmem>>, %arg10: memref<2x32x32xbf16, #tpu.memory_space<vmem>>, %arg11: memref<2x32x32xbf16, #tpu.memory_space<vmem>>, %arg12: memref<32x9xbf16, #tpu.memory_space<vmem>>, %arg13: memref<1x9xf32, #tpu.memory_space<vmem>>, %arg14: memref<2x8x3xf32, #tpu.memory_space<vmem>>, %arg15: memref<2x9xf32, #tpu.memory_space<vmem>>) attributes {dimension_semantics = [], scalar_prefetch = 0 : i64, scratch_operands = 0 : i64, tpu.core_type = #tpu.core_type<tc>} {
    %c0 = arith.constant 0 : index
    %c0_0 = arith.constant 0 : index
    %0 = vector.load %arg3[%c0, %c0_0] : memref<8x9xf32, #tpu.memory_space<vmem>>, vector<8x9xf32>
    %c0_1 = arith.constant 0 : index
    %c0_2 = arith.constant 0 : index
    %1 = vector.load %arg4[%c0_1, %c0_2] : memref<8x9xf32, #tpu.memory_space<vmem>>, vector<8x9xf32>
    %cst = arith.constant 1.000000e+00 : f32
    %2 = vector.broadcast %cst : f32 to vector<8x1xf32>
    %c0_3 = arith.constant 0 : index
    %c0_4 = arith.constant 0 : index
    %3 = vector.load %arg5[%c0_3, %c0_4] : memref<8x1xi32, #tpu.memory_space<vmem>>, vector<8x1xi32>
    %c0_5 = arith.constant 0 : index
    %c0_6 = arith.constant 0 : index
    %4 = vector.load %arg6[%c0_5, %c0_6] : memref<1x8xi32, #tpu.memory_space<vmem>>, vector<1x8xi32>
    %5 = vector.broadcast %3 : vector<8x1xi32> to vector<8x8xi32>
    %6 = vector.broadcast %4 : vector<1x8xi32> to vector<8x8xi32>
    %7 = arith.cmpi eq, %5, %6 : vector<8x8xi32>
    %8 = tpu.iota {dimensions = array<i32: 0>} : vector<8x8xi32>
    %9 = tpu.iota {dimensions = array<i32: 1>} : vector<8x8xi32>
    %10 = arith.cmpi ne, %8, %9 : vector<8x8xi32>
    %c0_7 = arith.constant 0 : index
    %c0_8 = arith.constant 0 : index
    %11 = vector.load %arg2[%c0_7, %c0_8] : memref<8x3xf32, #tpu.memory_space<vmem>>, vector<8x3xf32>
    %12 = vector.extract_strided_slice %11 {offsets = [0, 0], sizes = [8, 1], strides = [1, 1]} : vector<8x3xf32> to vector<8x1xf32>
    %13 = vector.extract_strided_slice %0 {offsets = [0, 0], sizes = [8, 3], strides = [1, 1]} : vector<8x9xf32> to vector<8x3xf32>
    %14 = vector.broadcast %12 : vector<8x1xf32> to vector<8x3xf32>
    %15 = arith.mulf %14, %13 : vector<8x3xf32>
    %16 = vector.extract_strided_slice %11 {offsets = [0, 1], sizes = [8, 1], strides = [1, 1]} : vector<8x3xf32> to vector<8x1xf32>
    %17 = vector.extract_strided_slice %0 {offsets = [0, 3], sizes = [8, 3], strides = [1, 1]} : vector<8x9xf32> to vector<8x3xf32>
    %18 = vector.broadcast %16 : vector<8x1xf32> to vector<8x3xf32>
    %19 = arith.mulf %18, %17 : vector<8x3xf32>
    %20 = arith.addf %15, %19 : vector<8x3xf32>
    %21 = vector.extract_strided_slice %11 {offsets = [0, 2], sizes = [8, 1], strides = [1, 1]} : vector<8x3xf32> to vector<8x1xf32>
    %22 = vector.extract_strided_slice %0 {offsets = [0, 6], sizes = [8, 3], strides = [1, 1]} : vector<8x9xf32> to vector<8x3xf32>
    %23 = vector.broadcast %21 : vector<8x1xf32> to vector<8x3xf32>
    %24 = arith.mulf %23, %22 : vector<8x3xf32>
    %25 = arith.addf %20, %24 : vector<8x3xf32>
    %26 = tpu.concatenate %25, %2 in 1 : vector<8x3xf32>, vector<8x1xf32> -> vector<8x4xf32>
    %cst_9 = arith.constant dense<0.000000e+00> : vector<8x8xf32>
    %27 = tpu.matmul %26, %26, %cst_9 {dimension_numbers = #tpu.dot_dimension_numbers<[1], [1], [0], [0], [0, 0, 1, 0], [], []>} : vector<8x4xf32>, vector<8x4xf32>, vector<8x8xf32> -> vector<8x8xf32>
    %28 = vector.extract_strided_slice %26 {offsets = [0, 0], sizes = [8, 1], strides = [1, 1]} : vector<8x4xf32> to vector<8x1xf32>
    %29 = vector.extract_strided_slice %26 {offsets = [0, 0], sizes = [8, 1], strides = [1, 1]} : vector<8x4xf32> to vector<8x1xf32>
    %30 = arith.mulf %28, %29 : vector<8x1xf32>
    %31 = vector.extract_strided_slice %26 {offsets = [0, 1], sizes = [8, 1], strides = [1, 1]} : vector<8x4xf32> to vector<8x1xf32>
    %32 = vector.extract_strided_slice %26 {offsets = [0, 1], sizes = [8, 1], strides = [1, 1]} : vector<8x4xf32> to vector<8x1xf32>
    %33 = arith.mulf %31, %32 : vector<8x1xf32>
    %34 = arith.addf %30, %33 : vector<8x1xf32>
    %35 = vector.extract_strided_slice %26 {offsets = [0, 2], sizes = [8, 1], strides = [1, 1]} : vector<8x4xf32> to vector<8x1xf32>
    %36 = vector.extract_strided_slice %26 {offsets = [0, 2], sizes = [8, 1], strides = [1, 1]} : vector<8x4xf32> to vector<8x1xf32>
    %37 = arith.mulf %35, %36 : vector<8x1xf32>
    %38 = arith.addf %34, %37 : vector<8x1xf32>
    %39 = tpu.transpose %38, [1, 0] : vector<8x1xf32> -> vector<1x8xf32>
    %40 = vector.broadcast %38 : vector<8x1xf32> to vector<8x8xf32>
    %41 = vector.broadcast %39 : vector<1x8xf32> to vector<8x8xf32>
    %42 = arith.addf %40, %41 : vector<8x8xf32>
    %cst_10 = arith.constant 1.000000e+00 : f32
    %43 = vector.broadcast %cst_10 : f32 to vector<8x8xf32>
    %44 = arith.subf %27, %43 : vector<8x8xf32>
    %cst_11 = arith.constant 2.000000e+00 : f32
    %45 = vector.broadcast %cst_11 : f32 to vector<8x8xf32>
    %46 = arith.mulf %45, %44 : vector<8x8xf32>
    %47 = arith.subf %42, %46 : vector<8x8xf32>
    %cst_12 = arith.constant 0.000000e+00 : f32
    %48 = vector.broadcast %cst_12 : f32 to vector<8x8xf32>
    %49 = arith.maximumf %47, %48 : vector<8x8xf32>
    %50 = arith.andi %7, %10 : vector<8x8xi1>
    %c0_13 = arith.constant 0 : index
    %c0_14 = arith.constant 0 : index
    %51 = vector.load %arg7[%c0_13, %c0_14] : memref<8x1xf32, #tpu.memory_space<vmem>>, vector<8x1xf32>
    %52 = vector.broadcast %51 : vector<8x1xf32> to vector<8x8xf32>
    %53 = arith.cmpf ole, %49, %52 : vector<8x8xf32>
    %54 = arith.andi %50, %53 : vector<8x8xi1>
    %cst_15 = arith.constant 1.000000e+00 : f32
    %cst_16 = arith.constant 0.000000e+00 : f32
    %55 = vector.broadcast %cst_15 : f32 to vector<8x8xf32>
    %56 = vector.broadcast %cst_16 : f32 to vector<8x8xf32>
    %57 = arith.select %54, %55, %56 : vector<8x8xi1>, vector<8x8xf32>
    %c0_17 = arith.constant 0 : index
    %c0_18 = arith.constant 0 : index
    %58 = vector.load %arg1[%c0_17, %c0_18] : memref<8x16xbf16, #tpu.memory_space<vmem>>, vector<8x16xbf16>
    %c0_19 = arith.constant 0 : index
    %c0_20 = arith.constant 0 : index
    %59 = vector.load %arg8[%c0_19, %c0_20] : memref<16x32xbf16, #tpu.memory_space<vmem>>, vector<16x32xbf16>
    %cst_21 = arith.constant dense<0.000000e+00> : vector<8x32xf32>
    %60 = tpu.matmul %58, %59, %cst_21 {dimension_numbers = #tpu.dot_dimension_numbers<[1], [0], [0], [1], [0, 0, 1, 1], [], []>} : vector<8x16xbf16>, vector<16x32xbf16>, vector<8x32xf32> -> vector<8x32xf32>
    %c0_22 = arith.constant 0 : index
    %c0_23 = arith.constant 0 : index
    %61 = vector.load %arg9[%c0_22, %c0_23] : memref<1x32xf32, #tpu.memory_space<vmem>>, vector<1x32xf32>
    %62 = vector.broadcast %61 : vector<1x32xf32> to vector<8x32xf32>
    %63 = arith.addf %60, %62 : vector<8x32xf32>
    %64 = math.tanh %63 : vector<8x32xf32>
    %c0_i32 = arith.constant 0 : i32
    %c2_i32 = arith.constant 2 : i32
    %65 = arith.muli %c2_i32, %c0_i32 : i32
    %66 = arith.index_cast %65 : i32 to index
    %67 = memref.load %arg0[%66] : memref<4xf32, #tpu.memory_space<smem>>
    %c2_i32_24 = arith.constant 2 : i32
    %68 = arith.muli %c2_i32_24, %c0_i32 : i32
    %c1_i32 = arith.constant 1 : i32
    %69 = arith.addi %68, %c1_i32 : i32
    %70 = arith.index_cast %69 : i32 to index
    %71 = memref.load %arg0[%70] : memref<4xf32, #tpu.memory_space<smem>>
    %cst_25 = arith.constant 9.99999997E-7 : f32
    %72 = vector.broadcast %cst_25 : f32 to vector<8x8xf32>
    %73 = arith.addf %49, %72 : vector<8x8xf32>
    %74 = math.rsqrt %73 : vector<8x8xf32>
    %75 = arith.mulf %49, %74 : vector<8x8xf32>
    %76 = arith.truncf %64 : vector<8x32xf32> to vector<8x32xbf16>
    %77 = arith.index_cast %c0_i32 : i32 to index
    %c0_26 = arith.constant 0 : index
    %c0_27 = arith.constant 0 : index
    %78 = vector.load %arg10[%77, %c0_26, %c0_27] : memref<2x32x32xbf16, #tpu.memory_space<vmem>>, vector<1x32x32xbf16>
    %79 = vector.shape_cast %78 : vector<1x32x32xbf16> to vector<32x32xbf16>
    %cst_28 = arith.constant dense<0.000000e+00> : vector<8x32xf32>
    %80 = tpu.matmul %76, %79, %cst_28 {dimension_numbers = #tpu.dot_dimension_numbers<[1], [0], [0], [1], [0, 0, 1, 1], [], []>} : vector<8x32xbf16>, vector<32x32xbf16>, vector<8x32xf32> -> vector<8x32xf32>
    %81 = arith.index_cast %c0_i32 : i32 to index
    %c0_29 = arith.constant 0 : index
    %c0_30 = arith.constant 0 : index
    %82 = vector.load %arg11[%81, %c0_29, %c0_30] : memref<2x32x32xbf16, #tpu.memory_space<vmem>>, vector<1x32x32xbf16>
    %83 = vector.shape_cast %82 : vector<1x32x32xbf16> to vector<32x32xbf16>
    %cst_31 = arith.constant dense<0.000000e+00> : vector<8x32xf32>
    %84 = tpu.matmul %76, %83, %cst_31 {dimension_numbers = #tpu.dot_dimension_numbers<[1], [0], [0], [1], [0, 0, 1, 1], [], []>} : vector<8x32xbf16>, vector<32x32xbf16>, vector<8x32xf32> -> vector<8x32xf32>
    %85 = arith.truncf %80 : vector<8x32xf32> to vector<8x32xbf16>
    %cst_32 = arith.constant dense<0.000000e+00> : vector<8x8xf32>
    %86 = tpu.matmul %85, %76, %cst_32 {dimension_numbers = #tpu.dot_dimension_numbers<[1], [1], [0], [0], [0, 0, 1, 0], [], []>} : vector<8x32xbf16>, vector<8x32xbf16>, vector<8x8xf32> -> vector<8x8xf32>
    %cst_33 = arith.constant 0.176776692 : f32
    %87 = vector.broadcast %cst_33 : f32 to vector<8x8xf32>
    %88 = arith.mulf %86, %87 : vector<8x8xf32>
    %89 = vector.broadcast %67 : f32 to vector<8x8xf32>
    %90 = arith.mulf %89, %75 : vector<8x8xf32>
    %91 = arith.subf %88, %90 : vector<8x8xf32>
    %cst_34 = arith.constant 5.000000e-01 : f32
    %92 = vector.broadcast %cst_34 : f32 to vector<8x8xf32>
    %93 = arith.mulf %92, %91 : vector<8x8xf32>
    %94 = math.tanh %93 : vector<8x8xf32>
    %cst_35 = arith.constant 1.000000e+00 : f32
    %95 = vector.broadcast %cst_35 : f32 to vector<8x8xf32>
    %96 = arith.addf %94, %95 : vector<8x8xf32>
    %cst_36 = arith.constant 5.000000e-01 : f32
    %97 = vector.broadcast %cst_36 : f32 to vector<8x8xf32>
    %98 = arith.mulf %97, %96 : vector<8x8xf32>
    %cst_37 = arith.constant 2.000000e+00 : f32
    %99 = vector.broadcast %cst_37 : f32 to vector<8x8xf32>
    %100 = arith.mulf %99, %94 : vector<8x8xf32>
    %101 = arith.mulf %94, %94 : vector<8x8xf32>
    %cst_38 = arith.constant 1.000000e+00 : f32
    %102 = vector.broadcast %cst_38 : f32 to vector<8x8xf32>
    %103 = arith.addf %102, %101 : vector<8x8xf32>
    %104 = tpu.reciprocal %103 : vector<8x8xf32> -> vector<8x8xf32>
    %105 = arith.mulf %100, %104 : vector<8x8xf32>
    %106 = arith.mulf %98, %57 : vector<8x8xf32>
    %107 = arith.truncf %106 : vector<8x8xf32> to vector<8x8xbf16>
    %108 = arith.truncf %84 : vector<8x32xf32> to vector<8x32xbf16>
    %cst_39 = arith.constant dense<0.000000e+00> : vector<8x32xf32>
    %109 = tpu.matmul %107, %108, %cst_39 {dimension_numbers = #tpu.dot_dimension_numbers<[1], [0], [0], [1], [0, 0, 1, 1], [], []>} : vector<8x8xbf16>, vector<8x32xbf16>, vector<8x32xf32> -> vector<8x32xf32>
    %110 = math.tanh %109 : vector<8x32xf32>
    %111 = arith.addf %64, %110 : vector<8x32xf32>
    %112 = arith.mulf %105, %57 : vector<8x8xf32>
    %113 = vector.broadcast %71 : f32 to vector<8x8xf32>
    %114 = arith.mulf %113, %74 : vector<8x8xf32>
    %115 = arith.mulf %112, %114 : vector<8x8xf32>
    %cst_40 = arith.constant dense<0.000000e+00> : vector<8x4xf32>
    %116 = tpu.matmul %115, %26, %cst_40 {dimension_numbers = #tpu.dot_dimension_numbers<[1], [0], [0], [1], [0, 0, 1, 1], [], []>} : vector<8x8xf32>, vector<8x4xf32>, vector<8x4xf32> -> vector<8x4xf32>
    %117 = vector.extract_strided_slice %116 {offsets = [0, 0], sizes = [8, 3], strides = [1, 1]} : vector<8x4xf32> to vector<8x3xf32>
    %118 = vector.extract_strided_slice %116 {offsets = [0, 3], sizes = [8, 1], strides = [1, 1]} : vector<8x4xf32> to vector<8x1xf32>
    %119 = vector.extract_strided_slice %26 {offsets = [0, 0], sizes = [8, 3], strides = [1, 1]} : vector<8x4xf32> to vector<8x3xf32>
    %120 = vector.broadcast %118 : vector<8x1xf32> to vector<8x3xf32>
    %121 = arith.mulf %120, %119 : vector<8x3xf32>
    %122 = arith.subf %117, %121 : vector<8x3xf32>
    %123 = vector.extract_strided_slice %122 {offsets = [0, 0], sizes = [8, 1], strides = [1, 1]} : vector<8x3xf32> to vector<8x1xf32>
    %124 = vector.extract_strided_slice %1 {offsets = [0, 0], sizes = [8, 3], strides = [1, 1]} : vector<8x9xf32> to vector<8x3xf32>
    %125 = vector.broadcast %123 : vector<8x1xf32> to vector<8x3xf32>
    %126 = arith.mulf %125, %124 : vector<8x3xf32>
    %127 = vector.extract_strided_slice %122 {offsets = [0, 1], sizes = [8, 1], strides = [1, 1]} : vector<8x3xf32> to vector<8x1xf32>
    %128 = vector.extract_strided_slice %1 {offsets = [0, 3], sizes = [8, 3], strides = [1, 1]} : vector<8x9xf32> to vector<8x3xf32>
    %129 = vector.broadcast %127 : vector<8x1xf32> to vector<8x3xf32>
    %130 = arith.mulf %129, %128 : vector<8x3xf32>
    %131 = arith.addf %126, %130 : vector<8x3xf32>
    %132 = vector.extract_strided_slice %122 {offsets = [0, 2], sizes = [8, 1], strides = [1, 1]} : vector<8x3xf32> to vector<8x1xf32>
    %133 = vector.extract_strided_slice %1 {offsets = [0, 6], sizes = [8, 3], strides = [1, 1]} : vector<8x9xf32> to vector<8x3xf32>
    %134 = vector.broadcast %132 : vector<8x1xf32> to vector<8x3xf32>
    %135 = arith.mulf %134, %133 : vector<8x3xf32>
    %136 = arith.addf %131, %135 : vector<8x3xf32>
    %137 = arith.addf %11, %136 : vector<8x3xf32>
    %138 = arith.index_cast %c0_i32 : i32 to index
    %c0_41 = arith.constant 0 : index
    %c0_42 = arith.constant 0 : index
    %139 = vector.load %arg14[%138, %c0_41, %c0_42] : memref<2x8x3xf32, #tpu.memory_space<vmem>>, vector<1x8x3xf32>
    %140 = vector.shape_cast %139 : vector<1x8x3xf32> to vector<8x3xf32>
    %141 = vector.shape_cast %137 : vector<8x3xf32> to vector<1x8x3xf32>
    tpu.vector_store %arg14[%138, %c0_41, %c0_42], %141 {strides = array<i32>} : memref<2x8x3xf32, #tpu.memory_space<vmem>>, vector<1x8x3xf32>,
    %142 = vector.extract_strided_slice %137 {offsets = [0, 0], sizes = [8, 1], strides = [1, 1]} : vector<8x3xf32> to vector<8x1xf32>
    %143 = vector.extract_strided_slice %0 {offsets = [0, 0], sizes = [8, 3], strides = [1, 1]} : vector<8x9xf32> to vector<8x3xf32>
    %144 = vector.broadcast %142 : vector<8x1xf32> to vector<8x3xf32>
    %145 = arith.mulf %144, %143 : vector<8x3xf32>
    %146 = vector.extract_strided_slice %137 {offsets = [0, 1], sizes = [8, 1], strides = [1, 1]} : vector<8x3xf32> to vector<8x1xf32>
    %147 = vector.extract_strided_slice %0 {offsets = [0, 3], sizes = [8, 3], strides = [1, 1]} : vector<8x9xf32> to vector<8x3xf32>
    %148 = vector.broadcast %146 : vector<8x1xf32> to vector<8x3xf32>
    %149 = arith.mulf %148, %147 : vector<8x3xf32>
    %150 = arith.addf %145, %149 : vector<8x3xf32>
    %151 = vector.extract_strided_slice %137 {offsets = [0, 2], sizes = [8, 1], strides = [1, 1]} : vector<8x3xf32> to vector<8x1xf32>
    %152 = vector.extract_strided_slice %0 {offsets = [0, 6], sizes = [8, 3], strides = [1, 1]} : vector<8x9xf32> to vector<8x3xf32>
    %153 = vector.broadcast %151 : vector<8x1xf32> to vector<8x3xf32>
    %154 = arith.mulf %153, %152 : vector<8x3xf32>
    %155 = arith.addf %150, %154 : vector<8x3xf32>
    %156 = tpu.concatenate %155, %2 in 1 : vector<8x3xf32>, vector<8x1xf32> -> vector<8x4xf32>
    %cst_43 = arith.constant dense<0.000000e+00> : vector<8x8xf32>
    %157 = tpu.matmul %156, %156, %cst_43 {dimension_numbers = #tpu.dot_dimension_numbers<[1], [1], [0], [0], [0, 0, 1, 0], [], []>} : vector<8x4xf32>, vector<8x4xf32>, vector<8x8xf32> -> vector<8x8xf32>
    %158 = vector.extract_strided_slice %156 {offsets = [0, 0], sizes = [8, 1], strides = [1, 1]} : vector<8x4xf32> to vector<8x1xf32>
    %159 = vector.extract_strided_slice %156 {offsets = [0, 0], sizes = [8, 1], strides = [1, 1]} : vector<8x4xf32> to vector<8x1xf32>
    %160 = arith.mulf %158, %159 : vector<8x1xf32>
    %161 = vector.extract_strided_slice %156 {offsets = [0, 1], sizes = [8, 1], strides = [1, 1]} : vector<8x4xf32> to vector<8x1xf32>
    %162 = vector.extract_strided_slice %156 {offsets = [0, 1], sizes = [8, 1], strides = [1, 1]} : vector<8x4xf32> to vector<8x1xf32>
    %163 = arith.mulf %161, %162 : vector<8x1xf32>
    %164 = arith.addf %160, %163 : vector<8x1xf32>
    %165 = vector.extract_strided_slice %156 {offsets = [0, 2], sizes = [8, 1], strides = [1, 1]} : vector<8x4xf32> to vector<8x1xf32>
    %166 = vector.extract_strided_slice %156 {offsets = [0, 2], sizes = [8, 1], strides = [1, 1]} : vector<8x4xf32> to vector<8x1xf32>
    %167 = arith.mulf %165, %166 : vector<8x1xf32>
    %168 = arith.addf %164, %167 : vector<8x1xf32>
    %169 = tpu.transpose %168, [1, 0] : vector<8x1xf32> -> vector<1x8xf32>
    %170 = vector.broadcast %168 : vector<8x1xf32> to vector<8x8xf32>
    %171 = vector.broadcast %169 : vector<1x8xf32> to vector<8x8xf32>
    %172 = arith.addf %170, %171 : vector<8x8xf32>
    %cst_44 = arith.constant 1.000000e+00 : f32
    %173 = vector.broadcast %cst_44 : f32 to vector<8x8xf32>
    %174 = arith.subf %157, %173 : vector<8x8xf32>
    %cst_45 = arith.constant 2.000000e+00 : f32
    %175 = vector.broadcast %cst_45 : f32 to vector<8x8xf32>
    %176 = arith.mulf %175, %174 : vector<8x8xf32>
    %177 = arith.subf %172, %176 : vector<8x8xf32>
    %cst_46 = arith.constant 0.000000e+00 : f32
    %178 = vector.broadcast %cst_46 : f32 to vector<8x8xf32>
    %179 = arith.maximumf %177, %178 : vector<8x8xf32>
    %c1_i32_47 = arith.constant 1 : i32
    %c2_i32_48 = arith.constant 2 : i32
    %180 = arith.muli %c2_i32_48, %c1_i32_47 : i32
    %181 = arith.index_cast %180 : i32 to index
    %182 = memref.load %arg0[%181] : memref<4xf32, #tpu.memory_space<smem>>
    %c2_i32_49 = arith.constant 2 : i32
    %183 = arith.muli %c2_i32_49, %c1_i32_47 : i32
    %c1_i32_50 = arith.constant 1 : i32
    %184 = arith.addi %183, %c1_i32_50 : i32
    %185 = arith.index_cast %184 : i32 to index
    %186 = memref.load %arg0[%185] : memref<4xf32, #tpu.memory_space<smem>>
    %cst_51 = arith.constant 9.99999997E-7 : f32
    %187 = vector.broadcast %cst_51 : f32 to vector<8x8xf32>
    %188 = arith.addf %179, %187 : vector<8x8xf32>
    %189 = math.rsqrt %188 : vector<8x8xf32>
    %190 = arith.mulf %179, %189 : vector<8x8xf32>
    %191 = arith.truncf %111 : vector<8x32xf32> to vector<8x32xbf16>
    %192 = arith.index_cast %c1_i32_47 : i32 to index
    %c0_52 = arith.constant 0 : index
    %c0_53 = arith.constant 0 : index
    %193 = vector.load %arg10[%192, %c0_52, %c0_53] : memref<2x32x32xbf16, #tpu.memory_space<vmem>>, vector<1x32x32xbf16>
    %194 = vector.shape_cast %193 : vector<1x32x32xbf16> to vector<32x32xbf16>
    %cst_54 = arith.constant dense<0.000000e+00> : vector<8x32xf32>
    %195 = tpu.matmul %191, %194, %cst_54 {dimension_numbers = #tpu.dot_dimension_numbers<[1], [0], [0], [1], [0, 0, 1, 1], [], []>} : vector<8x32xbf16>, vector<32x32xbf16>, vector<8x32xf32> -> vector<8x32xf32>
    %196 = arith.index_cast %c1_i32_47 : i32 to index
    %c0_55 = arith.constant 0 : index
    %c0_56 = arith.constant 0 : index
    %197 = vector.load %arg11[%196, %c0_55, %c0_56] : memref<2x32x32xbf16, #tpu.memory_space<vmem>>, vector<1x32x32xbf16>
    %198 = vector.shape_cast %197 : vector<1x32x32xbf16> to vector<32x32xbf16>
    %cst_57 = arith.constant dense<0.000000e+00> : vector<8x32xf32>
    %199 = tpu.matmul %191, %198, %cst_57 {dimension_numbers = #tpu.dot_dimension_numbers<[1], [0], [0], [1], [0, 0, 1, 1], [], []>} : vector<8x32xbf16>, vector<32x32xbf16>, vector<8x32xf32> -> vector<8x32xf32>
    %200 = arith.truncf %195 : vector<8x32xf32> to vector<8x32xbf16>
    %cst_58 = arith.constant dense<0.000000e+00> : vector<8x8xf32>
    %201 = tpu.matmul %200, %191, %cst_58 {dimension_numbers = #tpu.dot_dimension_numbers<[1], [1], [0], [0], [0, 0, 1, 0], [], []>} : vector<8x32xbf16>, vector<8x32xbf16>, vector<8x8xf32> -> vector<8x8xf32>
    %cst_59 = arith.constant 0.176776692 : f32
    %202 = vector.broadcast %cst_59 : f32 to vector<8x8xf32>
    %203 = arith.mulf %201, %202 : vector<8x8xf32>
    %204 = vector.broadcast %182 : f32 to vector<8x8xf32>
    %205 = arith.mulf %204, %190 : vector<8x8xf32>
    %206 = arith.subf %203, %205 : vector<8x8xf32>
    %cst_60 = arith.constant 5.000000e-01 : f32
    %207 = vector.broadcast %cst_60 : f32 to vector<8x8xf32>
    %208 = arith.mulf %207, %206 : vector<8x8xf32>
    %209 = math.tanh %208 : vector<8x8xf32>
    %cst_61 = arith.constant 1.000000e+00 : f32
    %210 = vector.broadcast %cst_61 : f32 to vector<8x8xf32>
    %211 = arith.addf %209, %210 : vector<8x8xf32>
    %cst_62 = arith.constant 5.000000e-01 : f32
    %212 = vector.broadcast %cst_62 : f32 to vector<8x8xf32>
    %213 = arith.mulf %212, %211 : vector<8x8xf32>
    %cst_63 = arith.constant 2.000000e+00 : f32
    %214 = vector.broadcast %cst_63 : f32 to vector<8x8xf32>
    %215 = arith.mulf %214, %209 : vector<8x8xf32>
    %216 = arith.mulf %209, %209 : vector<8x8xf32>
    %cst_64 = arith.constant 1.000000e+00 : f32
    %217 = vector.broadcast %cst_64 : f32 to vector<8x8xf32>
    %218 = arith.addf %217, %216 : vector<8x8xf32>
    %219 = tpu.reciprocal %218 : vector<8x8xf32> -> vector<8x8xf32>
    %220 = arith.mulf %215, %219 : vector<8x8xf32>
    %221 = arith.mulf %213, %57 : vector<8x8xf32>
    %222 = arith.truncf %221 : vector<8x8xf32> to vector<8x8xbf16>
    %223 = arith.truncf %199 : vector<8x32xf32> to vector<8x32xbf16>
    %cst_65 = arith.constant dense<0.000000e+00> : vector<8x32xf32>
    %224 = tpu.matmul %222, %223, %cst_65 {dimension_numbers = #tpu.dot_dimension_numbers<[1], [0], [0], [1], [0, 0, 1, 1], [], []>} : vector<8x8xbf16>, vector<8x32xbf16>, vector<8x32xf32> -> vector<8x32xf32>
    %225 = math.tanh %224 : vector<8x32xf32>
    %226 = arith.addf %111, %225 : vector<8x32xf32>
    %227 = arith.mulf %220, %57 : vector<8x8xf32>
    %228 = vector.broadcast %186 : f32 to vector<8x8xf32>
    %229 = arith.mulf %228, %189 : vector<8x8xf32>
    %230 = arith.mulf %227, %229 : vector<8x8xf32>
    %cst_66 = arith.constant dense<0.000000e+00> : vector<8x4xf32>
    %231 = tpu.matmul %230, %156, %cst_66 {dimension_numbers = #tpu.dot_dimension_numbers<[1], [0], [0], [1], [0, 0, 1, 1], [], []>} : vector<8x8xf32>, vector<8x4xf32>, vector<8x4xf32> -> vector<8x4xf32>
    %232 = vector.extract_strided_slice %231 {offsets = [0, 0], sizes = [8, 3], strides = [1, 1]} : vector<8x4xf32> to vector<8x3xf32>
    %233 = vector.extract_strided_slice %231 {offsets = [0, 3], sizes = [8, 1], strides = [1, 1]} : vector<8x4xf32> to vector<8x1xf32>
    %234 = vector.extract_strided_slice %156 {offsets = [0, 0], sizes = [8, 3], strides = [1, 1]} : vector<8x4xf32> to vector<8x3xf32>
    %235 = vector.broadcast %233 : vector<8x1xf32> to vector<8x3xf32>
    %236 = arith.mulf %235, %234 : vector<8x3xf32>
    %237 = arith.subf %232, %236 : vector<8x3xf32>
    %238 = vector.extract_strided_slice %237 {offsets = [0, 0], sizes = [8, 1], strides = [1, 1]} : vector<8x3xf32> to vector<8x1xf32>
    %239 = vector.extract_strided_slice %1 {offsets = [0, 0], sizes = [8, 3], strides = [1, 1]} : vector<8x9xf32> to vector<8x3xf32>
    %240 = vector.broadcast %238 : vector<8x1xf32> to vector<8x3xf32>
    %241 = arith.mulf %240, %239 : vector<8x3xf32>
    %242 = vector.extract_strided_slice %237 {offsets = [0, 1], sizes = [8, 1], strides = [1, 1]} : vector<8x3xf32> to vector<8x1xf32>
    %243 = vector.extract_strided_slice %1 {offsets = [0, 3], sizes = [8, 3], strides = [1, 1]} : vector<8x9xf32> to vector<8x3xf32>
    %244 = vector.broadcast %242 : vector<8x1xf32> to vector<8x3xf32>
    %245 = arith.mulf %244, %243 : vector<8x3xf32>
    %246 = arith.addf %241, %245 : vector<8x3xf32>
    %247 = vector.extract_strided_slice %237 {offsets = [0, 2], sizes = [8, 1], strides = [1, 1]} : vector<8x3xf32> to vector<8x1xf32>
    %248 = vector.extract_strided_slice %1 {offsets = [0, 6], sizes = [8, 3], strides = [1, 1]} : vector<8x9xf32> to vector<8x3xf32>
    %249 = vector.broadcast %247 : vector<8x1xf32> to vector<8x3xf32>
    %250 = arith.mulf %249, %248 : vector<8x3xf32>
    %251 = arith.addf %246, %250 : vector<8x3xf32>
    %252 = arith.addf %137, %251 : vector<8x3xf32>
    %253 = arith.index_cast %c1_i32_47 : i32 to index
    %c0_67 = arith.constant 0 : index
    %c0_68 = arith.constant 0 : index
    %254 = vector.load %arg14[%253, %c0_67, %c0_68] : memref<2x8x3xf32, #tpu.memory_space<vmem>>, vector<1x8x3xf32>
    %255 = vector.shape_cast %254 : vector<1x8x3xf32> to vector<8x3xf32>
    %256 = vector.shape_cast %252 : vector<8x3xf32> to vector<1x8x3xf32>
    tpu.vector_store %arg14[%253, %c0_67, %c0_68], %256 {strides = array<i32>} : memref<2x8x3xf32, #tpu.memory_space<vmem>>, vector<1x8x3xf32>,
    %257 = vector.extract_strided_slice %252 {offsets = [0, 0], sizes = [8, 1], strides = [1, 1]} : vector<8x3xf32> to vector<8x1xf32>
    %258 = vector.extract_strided_slice %0 {offsets = [0, 0], sizes = [8, 3], strides = [1, 1]} : vector<8x9xf32> to vector<8x3xf32>
    %259 = vector.broadcast %257 : vector<8x1xf32> to vector<8x3xf32>
    %260 = arith.mulf %259, %258 : vector<8x3xf32>
    %261 = vector.extract_strided_slice %252 {offsets = [0, 1], sizes = [8, 1], strides = [1, 1]} : vector<8x3xf32> to vector<8x1xf32>
    %262 = vector.extract_strided_slice %0 {offsets = [0, 3], sizes = [8, 3], strides = [1, 1]} : vector<8x9xf32> to vector<8x3xf32>
    %263 = vector.broadcast %261 : vector<8x1xf32> to vector<8x3xf32>
    %264 = arith.mulf %263, %262 : vector<8x3xf32>
    %265 = arith.addf %260, %264 : vector<8x3xf32>
    %266 = vector.extract_strided_slice %252 {offsets = [0, 2], sizes = [8, 1], strides = [1, 1]} : vector<8x3xf32> to vector<8x1xf32>
    %267 = vector.extract_strided_slice %0 {offsets = [0, 6], sizes = [8, 3], strides = [1, 1]} : vector<8x9xf32> to vector<8x3xf32>
    %268 = vector.broadcast %266 : vector<8x1xf32> to vector<8x3xf32>
    %269 = arith.mulf %268, %267 : vector<8x3xf32>
    %270 = arith.addf %265, %269 : vector<8x3xf32>
    %271 = tpu.concatenate %270, %2 in 1 : vector<8x3xf32>, vector<8x1xf32> -> vector<8x4xf32>
    %cst_69 = arith.constant dense<0.000000e+00> : vector<8x8xf32>
    %272 = tpu.matmul %271, %271, %cst_69 {dimension_numbers = #tpu.dot_dimension_numbers<[1], [1], [0], [0], [0, 0, 1, 0], [], []>} : vector<8x4xf32>, vector<8x4xf32>, vector<8x8xf32> -> vector<8x8xf32>
    %273 = vector.extract_strided_slice %271 {offsets = [0, 0], sizes = [8, 1], strides = [1, 1]} : vector<8x4xf32> to vector<8x1xf32>
    %274 = vector.extract_strided_slice %271 {offsets = [0, 0], sizes = [8, 1], strides = [1, 1]} : vector<8x4xf32> to vector<8x1xf32>
    %275 = arith.mulf %273, %274 : vector<8x1xf32>
    %276 = vector.extract_strided_slice %271 {offsets = [0, 1], sizes = [8, 1], strides = [1, 1]} : vector<8x4xf32> to vector<8x1xf32>
    %277 = vector.extract_strided_slice %271 {offsets = [0, 1], sizes = [8, 1], strides = [1, 1]} : vector<8x4xf32> to vector<8x1xf32>
    %278 = arith.mulf %276, %277 : vector<8x1xf32>
    %279 = arith.addf %275, %278 : vector<8x1xf32>
    %280 = vector.extract_strided_slice %271 {offsets = [0, 2], sizes = [8, 1], strides = [1, 1]} : vector<8x4xf32> to vector<8x1xf32>
    %281 = vector.extract_strided_slice %271 {offsets = [0, 2], sizes = [8, 1], strides = [1, 1]} : vector<8x4xf32> to vector<8x1xf32>
    %282 = arith.mulf %280, %281 : vector<8x1xf32>
    %283 = arith.addf %279, %282 : vector<8x1xf32>
    %284 = tpu.transpose %283, [1, 0] : vector<8x1xf32> -> vector<1x8xf32>
    %285 = vector.broadcast %283 : vector<8x1xf32> to vector<8x8xf32>
    %286 = vector.broadcast %284 : vector<1x8xf32> to vector<8x8xf32>
    %287 = arith.addf %285, %286 : vector<8x8xf32>
    %cst_70 = arith.constant 1.000000e+00 : f32
    %288 = vector.broadcast %cst_70 : f32 to vector<8x8xf32>
    %289 = arith.subf %272, %288 : vector<8x8xf32>
    %cst_71 = arith.constant 2.000000e+00 : f32
    %290 = vector.broadcast %cst_71 : f32 to vector<8x8xf32>
    %291 = arith.mulf %290, %289 : vector<8x8xf32>
    %292 = arith.subf %287, %291 : vector<8x8xf32>
    %cst_72 = arith.constant 0.000000e+00 : f32
    %293 = vector.broadcast %cst_72 : f32 to vector<8x8xf32>
    %294 = arith.maximumf %292, %293 : vector<8x8xf32>
    %c2_i32_73 = arith.constant 2 : i32
    %295 = tpu.iota {dimensions = array<i32: 0>} : vector<2x8xi32>
    %296 = vector.broadcast %4 : vector<1x8xi32> to vector<2x8xi32>
    %297 = arith.cmpi eq, %295, %296 : vector<2x8xi32>
    %cst_74 = arith.constant 1.000000e+00 : f32
    %cst_75 = arith.constant 0.000000e+00 : f32
    %298 = vector.broadcast %cst_74 : f32 to vector<2x8xf32>
    %299 = vector.broadcast %cst_75 : f32 to vector<2x8xf32>
    %300 = arith.select %297, %298, %299 : vector<2x8xi1>, vector<2x8xf32>
    %301 = arith.truncf %300 : vector<2x8xf32> to vector<2x8xbf16>
    %302 = arith.truncf %226 : vector<8x32xf32> to vector<8x32xbf16>
    %cst_76 = arith.constant dense<0.000000e+00> : vector<2x32xf32>
    %303 = tpu.matmul %301, %302, %cst_76 {dimension_numbers = #tpu.dot_dimension_numbers<[1], [0], [0], [1], [0, 0, 1, 1], [], []>} : vector<2x8xbf16>, vector<8x32xbf16>, vector<2x32xf32> -> vector<2x32xf32>
    %304 = arith.truncf %303 : vector<2x32xf32> to vector<2x32xbf16>
    %c0_77 = arith.constant 0 : index
    %c0_78 = arith.constant 0 : index
    %305 = vector.load %arg12[%c0_77, %c0_78] : memref<32x9xbf16, #tpu.memory_space<vmem>>, vector<32x9xbf16>
    %cst_79 = arith.constant dense<0.000000e+00> : vector<2x9xf32>
    %306 = tpu.matmul %304, %305, %cst_79 {dimension_numbers = #tpu.dot_dimension_numbers<[1], [0], [0], [1], [0, 0, 1, 1], [], []>} : vector<2x32xbf16>, vector<32x9xbf16>, vector<2x9xf32> -> vector<2x9xf32>
    %c0_80 = arith.constant 0 : index
    %c0_81 = arith.constant 0 : index
    %307 = vector.load %arg13[%c0_80, %c0_81] : memref<1x9xf32, #tpu.memory_space<vmem>>, vector<1x9xf32>
    %308 = vector.broadcast %307 : vector<1x9xf32> to vector<2x9xf32>
    %309 = arith.addf %306, %308 : vector<2x9xf32>
    %310 = math.tanh %309 : vector<2x9xf32>
    %c0_82 = arith.constant 0 : index
    %c0_83 = arith.constant 0 : index
    %311 = vector.load %arg15[%c0_82, %c0_83] : memref<2x9xf32, #tpu.memory_space<vmem>>, vector<2x9xf32>
    tpu.vector_store %arg15[%c0_82, %c0_83], %310 {strides = array<i32>} : memref<2x9xf32, #tpu.memory_space<vmem>>, vector<2x9xf32>,
    return
  }
}

</mosaic_0001>

<llo_original>
// kernel: tpu_custom_call.1
$region0: #{tpu_custom_call.1}
  #allocation0 [shape = 'u32[]', space=smem, size = 0x4, offset = 0x4, fixed_abs, tag = 'smem constant byte address 0x4 - core index']
  #allocation1 [shape = 'u32[72,128]{1,0:T(1,128)}', space=vmem, size = 0x9000, scoped, tag = 'internal scratch']
  %s0 = inlined_call_operand.vmem [shape: f32[4], index: 0, kind: input, shape index: {}]
  %s1 = inlined_call_operand.hbm [shape: bf16[8,16], index: 1, kind: input, shape index: {}]
  %s2 = inlined_call_operand.vmem [shape: f32[8,3], index: 2, kind: input, shape index: {}]
  %s3 = inlined_call_operand.vmem [shape: f32[8,9], index: 3, kind: input, shape index: {}]
  %s4 = inlined_call_operand.hbm [shape: f32[8,9], index: 4, kind: input, shape index: {}]
  %s5 = inlined_call_operand.vmem [shape: s32[8,1], index: 5, kind: input, shape index: {}]
  %s6 = inlined_call_operand.hbm [shape: s32[1,8], index: 6, kind: input, shape index: {}]
  %s7 = inlined_call_operand.vmem [shape: f32[8,1], index: 7, kind: input, shape index: {}]
  %s8 = inlined_call_operand.vmem [shape: bf16[16,32], index: 8, kind: input, shape index: {}]
  %s9 = inlined_call_operand.vmem [shape: f32[1,32], index: 9, kind: input, shape index: {}]
  %s10 = inlined_call_operand.vmem [shape: bf16[2,32,32], index: 10, kind: input, shape index: {}]
  %s11 = inlined_call_operand.hbm [shape: bf16[2,32,32], index: 11, kind: input, shape index: {}]
  %s12 = inlined_call_operand.vmem [shape: bf16[32,9], index: 12, kind: input, shape index: {}]
  %s13 = inlined_call_operand.vmem [shape: f32[1,9], index: 13, kind: input, shape index: {}]
  %s14 = inlined_call_operand.vmem [shape: f32[2,8,3], index: 14, kind: output, shape index: {0}]
  %s15 = inlined_call_operand.hbm [shape: f32[2,9], index: 15, kind: output, shape index: {1}]
  %16 = xla_tuple %s14, %s15
  %s17 = sld [smem:[#allocation0]]
  $region94: #{tpu_custom_call.1} parent=0
    _
  %s19 = ssub.s32 1, %s17
  %s20 = scalar_select 0, %s19, %s17
  $region1: #{tpu_custom_call.1} parent=0
    #allocation2 [shape = 'u8[512]{0}', space=smem, size = 0x200, scoped, tag = 'input window, operand 0, single buffered']
    #allocation3 [shape = 's32[1]{0}', space=sflag, size = 0x4, scoped, tag = 'scoped memory for tpu_custom_call.1']
    #allocation4 [shape = 's32[1]{0}', space=sflag, size = 0x4, scoped, tag = 'scoped memory for tpu_custom_call.1']
    #allocation5 [shape = 's32[1]{0}', space=sflag, size = 0x4, scoped, tag = 'scoped memory for tpu_custom_call.1']
    #allocation6 [shape = 'u8[2048]{0}', space=vmem, size = 0x800, scoped, tag = 'input window, operand 1, single buffered']
    #allocation7 [shape = 'u8[4096]{0}', space=vmem, size = 0x1000, scoped, tag = 'input window, operand 4, single buffered']
    #allocation8 [shape = 's32[1]{0}', space=sflag, size = 0x4, scoped, tag = 'scoped memory for tpu_custom_call.1']
    #allocation9 [shape = 'u8[512]{0}', space=vmem, size = 0x400, scoped, tag = 'input window, operand 6, single buffered']
    #allocation10 [shape = 'u8[16384]{0}', space=vmem, size = 0x4000, scoped, tag = 'input window, operand 11, single buffered']
    #allocation11 [shape = 's32[1]{0}', space=sflag, size = 0x4, scoped, tag = 'scoped memory for tpu_custom_call.1']
    #allocation12 [shape = 'u8[1024]{0}', space=vmem, size = 0x400, scoped, tag = 'output window, operand 1, single buffered']
    %21 = vsyncpa [#allocation5], 0
    %22 = vsyncpa [#allocation3], 0
    %23 = vsyncpa [#allocation8], 0
    %24 = vsyncpa [#allocation11], 0
    %25 = vsyncpa [#allocation4], 0
    // Predicated region
    $region2: #{tpu_custom_call.1} parent=1 // pred_check
      _
    $region3: #{tpu_custom_call.1} parent=1 // pred_check_branch
      %27 = sbr.rel (0) target = $region5
    $region4: #{tpu_custom_call.1} parent=1 // pred_region
      %29 = vsyncadd [#allocation5], 0
      %s31 = sshll.u32 %s0, 4
      %s32 = int_to_ptr.vmem [resolvable:$true] %s31
      %34 = dma.vmem_to_smem %s32, 16, [#allocation2], [#allocation5]
    $region5: #{tpu_custom_call.1} parent=1 // pred_fallthru
      _
    // Predicated region
    $region6: #{tpu_custom_call.1} parent=1 // pred_check
      _
    $region7: #{tpu_custom_call.1} parent=1 // pred_check_branch
      %36 = sbr.rel (0) target = $region9
    $region8: #{tpu_custom_call.1} parent=1 // pred_region
      %38 = vsyncadd [#allocation3], 0
      %s40 = sshll.u32 %s1, 4
      %s41 = int_to_ptr.hbm [resolvable:$true] %s40
      %s42 = sshll.u32 [#allocation6], 4
      %s43 = int_to_ptr.vmem [resolvable:$true] %s42
      %45 = dma.hbm_to_vmem [thread:$0]  %s41, 64, %s43, [#allocation3]
    $region9: #{tpu_custom_call.1} parent=1 // pred_fallthru
      _
    // Predicated region
    $region10: #{tpu_custom_call.1} parent=1 // pred_check
      _
    $region11: #{tpu_custom_call.1} parent=1 // pred_check_branch
      %47 = sbr.rel (0) target = $region13
    $region12: #{tpu_custom_call.1} parent=1 // pred_region
      _
    $region13: #{tpu_custom_call.1} parent=1 // pred_fallthru
      _
    // Predicated region
    $region14: #{tpu_custom_call.1} parent=1 // pred_check
      _
    $region15: #{tpu_custom_call.1} parent=1 // pred_check_branch
      %49 = sbr.rel (0) target = $region17
    $region16: #{tpu_custom_call.1} parent=1 // pred_region
      _
    $region17: #{tpu_custom_call.1} parent=1 // pred_fallthru
      _
    // Predicated region
    $region18: #{tpu_custom_call.1} parent=1 // pred_check
      _
    $region19: #{tpu_custom_call.1} parent=1 // pred_check_branch
      %51 = sbr.rel (0) target = $region21
    $region20: #{tpu_custom_call.1} parent=1 // pred_region
      %53 = vsyncadd [#allocation8], 0
      %s55 = sshll.u32 %s4, 4
      %s56 = int_to_ptr.hbm [resolvable:$true] %s55
      %s57 = sshll.u32 [#allocation7], 4
      %s58 = int_to_ptr.vmem [resolvable:$true] %s57
      %60 = dma.hbm_to_vmem [thread:$0]  %s56, 128, %s58, [#allocation8]
    $region21: #{tpu_custom_call.1} parent=1 // pred_fallthru
      _
    // Predicated region
    $region22: #{tpu_custom_call.1} parent=1 // pred_check
      _
    $region23: #{tpu_custom_call.1} parent=1 // pred_check_branch
      %62 = sbr.rel (0) target = $region25
    $region24: #{tpu_custom_call.1} parent=1 // pred_region
      _
    $region25: #{tpu_custom_call.1} parent=1 // pred_fallthru
      _
    // Predicated region
    $region26: #{tpu_custom_call.1} parent=1 // pred_check
      _
    $region27: #{tpu_custom_call.1} parent=1 // pred_check_branch
      %64 = sbr.rel (0) target = $region29
    $region28: #{tpu_custom_call.1} parent=1 // pred_region
      %66 = vsyncadd [#allocation8], 0
      %s68 = sshll.u32 %s6, 4
      %s69 = int_to_ptr.hbm [resolvable:$true] %s68
      %s70 = sshll.u32 [#allocation9], 4
      %s71 = int_to_ptr.vmem [resolvable:$true] %s70
      %73 = dma.hbm_to_vmem [thread:$0]  %s69, 16, %s71, [#allocation8]
    $region29: #{tpu_custom_call.1} parent=1 // pred_fallthru
      _
    // Predicated region
    $region30: #{tpu_custom_call.1} parent=1 // pred_check
      _
    $region31: #{tpu_custom_call.1} parent=1 // pred_check_branch
      %75 = sbr.rel (0) target = $region33
    $region32: #{tpu_custom_call.1} parent=1 // pred_region
      _
    $region33: #{tpu_custom_call.1} parent=1 // pred_fallthru
      _
    // Predicated region
    $region34: #{tpu_custom_call.1} parent=1 // pred_check
      _
    $region35: #{tpu_custom_call.1} parent=1 // pred_check_branch
      %77 = sbr.rel (0) target = $region37
    $region36: #{tpu_custom_call.1} parent=1 // pred_region
      _
    $region37: #{tpu_custom_call.1} parent=1 // pred_fallthru
      _
    // Predicated region
    $region38: #{tpu_custom_call.1} parent=1 // pred_check
      _
    $region39: #{tpu_custom_call.1} parent=1 // pred_check_branch
      %79 = sbr.rel (0) target = $region41
    $region40: #{tpu_custom_call.1} parent=1 // pred_region
      _
    $region41: #{tpu_custom_call.1} parent=1 // pred_fallthru
      _
    // Predicated region
    $region42: #{tpu_custom_call.1} parent=1 // pred_check
      _
    $region43: #{tpu_custom_call.1} parent=1 // pred_check_branch
      %81 = sbr.rel (0) target = $region45
    $region44: #{tpu_custom_call.1} parent=1 // pred_region
      _
    $region45: #{tpu_custom_call.1} parent=1 // pred_fallthru
      _
    // Predicated region
    $region46: #{tpu_custom_call.1} parent=1 // pred_check
      _
    $region47: #{tpu_custom_call.1} parent=1 // pred_check_branch
      %83 = sbr.rel (0) target = $region49
    $region48: #{tpu_custom_call.1} parent=1 // pred_region
      %85 = vsyncadd [#allocation11], 0
      %s86 = sshll.u32 %s11, 4
      %s87 = int_to_ptr.hbm [resolvable:$true] %s86
      %s88 = sshll.u32 [#allocation10], 4
      %s89 = int_to_ptr.vmem [resolvable:$true] %s88
      %94 = dma.hbm_to_vmem [thread:$0]  %s87, 512, %s89, [#allocation11], 64, 64, 4
    $region49: #{tpu_custom_call.1} parent=1 // pred_fallthru
      _
    // Predicated region
    $region50: #{tpu_custom_call.1} parent=1 // pred_check
      _
    $region51: #{tpu_custom_call.1} parent=1 // pred_check_branch
      %96 = sbr.rel (0) target = $region53
    $region52: #{tpu_custom_call.1} parent=1 // pred_region
      _
    $region53: #{tpu_custom_call.1} parent=1 // pred_fallthru
      _
    // Predicated region
    $region54: #{tpu_custom_call.1} parent=1 // pred_check
      _
    $region55: #{tpu_custom_call.1} parent=1 // pred_check_branch
      %98 = sbr.rel (0) target = $region57
    $region56: #{tpu_custom_call.1} parent=1 // pred_region
      _
    $region57: #{tpu_custom_call.1} parent=1 // pred_fallthru
      _
    // Predicated region
    $region58: #{tpu_custom_call.1} parent=1 // pred_check
      _
    $region59: #{tpu_custom_call.1} parent=1 // pred_check_branch
      %100 = sbr.rel (0) target = $region61
    $region60: #{tpu_custom_call.1} parent=1 // pred_region
      %102 = dma.done [#allocation5], 16
    $region61: #{tpu_custom_call.1} parent=1 // pred_fallthru
      _
    // Predicated region
    $region62: #{tpu_custom_call.1} parent=1 // pred_check
      _
    $region63: #{tpu_custom_call.1} parent=1 // pred_check_branch
      %104 = sbr.rel (0) target = $region65
    $region64: #{tpu_custom_call.1} parent=1 // pred_region
      %106 = dma.done [#allocation3], 64
    $region65: #{tpu_custom_call.1} parent=1 // pred_fallthru
      _
    // Predicated region
    $region66: #{tpu_custom_call.1} parent=1 // pred_check
      _
    $region67: #{tpu_custom_call.1} parent=1 // pred_check_branch
      %108 = sbr.rel (0) target = $region69
    $region68: #{tpu_custom_call.1} parent=1 // pred_region
      %110 = dma.done [#allocation8], 128
    $region69: #{tpu_custom_call.1} parent=1 // pred_fallthru
      _
    // Predicated region
    $region70: #{tpu_custom_call.1} parent=1 // pred_check
      _
    $region71: #{tpu_custom_call.1} parent=1 // pred_check_branch
      %112 = sbr.rel (0) target = $region73
    $region72: #{tpu_custom_call.1} parent=1 // pred_region
      %114 = dma.done [#allocation8], 16
    $region73: #{tpu_custom_call.1} parent=1 // pred_fallthru
      _
    // Predicated region
    $region74: #{tpu_custom_call.1} parent=1 // pred_check
      _
    $region75: #{tpu_custom_call.1} parent=1 // pred_check_branch
      %116 = sbr.rel (0) target = $region77
    $region76: #{tpu_custom_call.1} parent=1 // pred_region
      %118 = dma.done [#allocation11], 512
    $region77: #{tpu_custom_call.1} parent=1 // pred_fallthru
      _
    %119 = sfence
    %v121 = vld [vmem:[%s3] sm:$0xff]
    %v122 = vld [vmem:[#allocation7] sm:$0xff]
    %v123 = vld [vmem:[%s5] sm:$0xff]
    %v124 = vld [vmem:[#allocation9] sm:$0x1]
    %125 = vset.pattern.permute.xlu0 0
    %126 = vperm.xlu0 %125, %v123
    %v127 = vpop.permute.xlu0 %126
    %v128 = vperm.slane %v124, 0
    %vm129 = vcmp.eq.s32.totalorder %v127, %v128
    %v130 = vlaneseq
    %v131 = vshrl.u32 %v130, 7
    %v132 = vlaneseq
    %v133 = vand.u32 %v132, 127
    %vm134 = vcmp.ne.s32.totalorder %v131, %v133
    %v135 = vld [vmem:[%s2] sm:$0xff]
    %137 = vset.pattern.permute.xlu0 0
    %138 = vperm.xlu0 %137, %v135
    %v139 = vpop.permute.xlu0 %138
    %v141 = vmul.f32 %v139, %v121
    %142 = vset.pattern.permute.xlu0 1
    %143 = vperm.xlu0 %142, %v135
    %v144 = vpop.permute.xlu0 %143
    %v146 = vmul.f32 %v144, %v121
    %148 = vrot.lane.b32.xlu0 %v146, 125
    %v149 = vpop.permute.xlu0 %148
    %v151 = vadd.f32 %v141, %v149
    %152 = vset.pattern.permute.xlu0 2
    %153 = vperm.xlu0 %152, %v135
    %v154 = vpop.permute.xlu0 %153
    %v156 = vmul.f32 %v154, %v121
    %158 = vrot.lane.b32.xlu0 %v156, 122
    %v159 = vpop.permute.xlu0 %158
    %v161 = vadd.f32 %v151, %v159
    %vm162 = vcmask 23552
    %v163 = vsel %vm162, %v161, 1.0
    %vm164 = vcmask 31744
    %v166 = vsel %vm164, %v163, 0
    %168 = vmatpush.xpose.msra.mxu0 0.0
    %169 = vmatpush.xpose.msra.mxu0 0.0
    %170 = vmatpush.xpose.msra.mxu0 0.0
    %171 = vmatpush.xpose.msra.mxu0 0.0
    %172 = vmatpush.xpose.msra.mxu0 0.0
    %173 = vmatpush.xpose.msra.mxu0 0.0
    %174 = vmatpush.xpose.msra.mxu0 0.0
    %175 = vmatpush.xpose.msra.mxu0 0.0
    %176 = vmatpush.xpose.msra.mxu0 0.0
    %177 = vmatpush.xpose.msra.mxu0 0.0
    %178 = vmatpush.xpose.msra.mxu0 0.0
    %179 = vmatpush.xpose.msra.mxu0 0.0
    %180 = vmatpush.xpose.msra.mxu0 0.0
    %181 = vmatpush.xpose.msra.mxu0 0.0
    %182 = vmatpush.xpose.msra.mxu0 0.0
    %183 = vmatpush.xpose.msra.mxu0 %v166
    %184 = vmatmul.f32.gmra.mxu0 %v166
    %v185 = vpop.f32.mrf.mxu0
    %v186 = vadd.f32 0.0, %v185
    %187 = vdwg.mxu0
    %v188 = vmul.f32 %v163, %v163
    %190 = vrot.lane.b32.xlu0 %v188, 127
    %v191 = vpop.permute.xlu0 %190
    %v193 = vadd.f32 %v188, %v191
    %194 = vrot.lane.b32.xlu0 %v188, 126
    %v195 = vpop.permute.xlu0 %194
    %v197 = vadd.f32 %v193, %v195
    %198 = vxpose.xlu0.b32.start [1/16] %v197, 128
    %199 = vxpose.xlu0.b32.cont [2/16] 0.0, 128
    %200 = vxpose.xlu0.b32.cont [3/16] 0.0, 128
    %201 = vxpose.xlu0.b32.cont [4/16] 0.0, 128
    %202 = vxpose.xlu0.b32.cont [5/16] 0.0, 128
    %203 = vxpose.xlu0.b32.cont [6/16] 0.0, 128
    %204 = vxpose.xlu0.b32.cont [7/16] 0.0, 128
    %205 = vxpose.xlu0.b32.cont [8/16] 0.0, 128
    %206 = vxpose.xlu0.b32.cont [9/16] 0.0, 128
    %207 = vxpose.xlu0.b32.cont [10/16] 0.0, 128
    %208 = vxpose.xlu0.b32.cont [11/16] 0.0, 128
    %209 = vxpose.xlu0.b32.cont [12/16] 0.0, 128
    %210 = vxpose.xlu0.b32.cont [13/16] 0.0, 128
    %211 = vxpose.xlu0.b32.cont [14/16] 0.0, 128
    %212 = vxpose.xlu0.b32.cont [15/16] 0.0, 128
    %213 = vxpose.xlu0.b32.end [16/16] 0.0, 128
    %v214 = vpop.trf.xlu0
    %v215 = vpop.trf.xlu0
    %v216 = vpop.trf.xlu0
    %v217 = vpop.trf.xlu0
    %v218 = vpop.trf.xlu0
    %v219 = vpop.trf.xlu0
    %v220 = vpop.trf.xlu0
    %v221 = vpop.trf.xlu0
    %v222 = vpop.trf.xlu0
    %v223 = vpop.trf.xlu0
    %v224 = vpop.trf.xlu0
    %v225 = vpop.trf.xlu0
    %v226 = vpop.trf.xlu0
    %v227 = vpop.trf.xlu0
    %v228 = vpop.trf.xlu0
    %v229 = vpop.trf.xlu0
    %231 = vset.pattern.permute.xlu0 0
    %232 = vperm.xlu0 %231, %v197
    %v233 = vpop.permute.xlu0 %232
    %v235 = vperm.slane %v214, 0
    %v236 = vadd.f32 %v233, %v235
    %v237 = vsub.f32 %v186, 1.0
    %v238 = vmul.f32 %v237, 2.0
    %v239 = vsub.f32 %v236, %v238
    %v240 = vmax.f32 %v239, 0.0
    %vm241 = vmand %vm129, %vm134
    %v242 = vld [vmem:[%s7] sm:$0xff]
    %244 = vset.pattern.permute.xlu0 0
    %245 = vperm.xlu0 %244, %v242
    %v246 = vpop.permute.xlu0 %245
    %vm248 = vcmp.le.f32.partialorder %v240, %v246
    %vm249 = vmand %vm241, %vm248
    %v250 = vsel %vm249, 1.0, 0.0
    %v251 = vld [vmem:[#allocation6] sm:$0xf]
    %v252 = vld [vmem:[%s8] sm:$0xf]
    %v253 = vld [vmem:[%s8 + $0x4] sm:$0xf]
    %v254 = vld [vmem:[%s9] sm:$0x1]
    %v256 = vperm.slane %v254, 0
    %v260 = vunpack.c.l.b16 %v252
    %v261 = vunpack.c.l.b16 %v253
    %v262 = vpack.c.b16 %v261, %v260
    %vm264 = vcmask 130048
    %v266 = vsel %vm264, %v251, 0
    %268 = vmatpush.bf16.msra.mxu0 0
    %269 = vmatpush.bf16.msra.mxu0 0
    %270 = vmatpush.bf16.msra.mxu0 0
    %271 = vmatpush.bf16.msra.mxu0 0
    %272 = vmatpush.bf16.msra.mxu0 0
    %273 = vmatpush.bf16.msra.mxu0 0
    %274 = vmatpush.bf16.msra.mxu0 0
    %275 = vmatpush.bf16.msra.mxu0 %v262
    %276 = vmatmul.bf16.gmra.mxu0 %v266
    %v277 = vpop.f32.mrf.mxu0
    %v278 = vadd.f32 %v256, %v277
    %v279 = vpop.f32.mrf.mxu0
    %280 = vdwg.mxu0
    %v281 = vtanh.pop %v278
    %s282 = sld [smem:[#allocation2]]
    %s283 = sld [smem:[#allocation2 + $0x1]]
    %v284 = vadd.f32 %v240, 1e-06
    %v285 = vrsqrt.pop %v284
    %v286 = vmul.f32 %v285, %v284
    %v287 = vmul.f32 %v286, %v285
    %v288 = vmul.f32 0.5, %v287
    %v289 = vsub.f32 1.5, %v288
    %v290 = vmul.f32 %v285, %v289
    %vm291 = vweird.f32 %v284
    %vm292 = vweird.f32 %v285
    %vm293 = vmor %vm291, %vm292
    %v294 = vsel %vm293, %v285, %v290
    %v295 = vmul.f32 %v240, %v294
    %v296 = vpack.c.bf16 %v281, %v281
    %v297 = vld [vmem:[%s10] sm:$0xf]
    %v298 = vld [vmem:[%s10 + $0x4] sm:$0xf]
    %v299 = vld [vmem:[%s10 + $0x8] sm:$0xf]
    %v300 = vld [vmem:[%s10 + $0xc] sm:$0xf]
    %v305 = vunpack.c.l.b16 %v297
    %v306 = vunpack.c.l.b16 %v298
    %v307 = vunpack.c.l.b16 %v299
    %v308 = vunpack.c.l.b16 %v300
    %v309 = vpack.c.b16 %v306, %v305
    %v310 = vpack.c.b16 %v308, %v307
    %vm313 = vcmask 261120
    %v315 = vsel %vm313, %v296, 0
    %317 = vmatpush.bf16.msra.mxu0 0
    %318 = vmatpush.bf16.msra.mxu0 0
    %319 = vmatpush.bf16.msra.mxu0 0
    %320 = vmatpush.bf16.msra.mxu0 0
    %321 = vmatpush.bf16.msra.mxu0 0
    %322 = vmatpush.bf16.msra.mxu0 0
    %323 = vmatpush.bf16.msra.mxu0 %v310
    %324 = vmatpush.bf16.msra.mxu0 %v309
    %325 = vmatmul.bf16.gmra.mxu0 %v315
    %v326 = vpop.f32.mrf.mxu0
    %v327 = vadd.f32 0.0, %v326
    %v328 = vpop.f32.mrf.mxu0
    %329 = vdwg.mxu0
    %v330 = vld [vmem:[#allocation10] sm:$0xf]
    %v331 = vld [vmem:[#allocation10 + $0x4] sm:$0xf]
    %v332 = vld [vmem:[#allocation10 + $0x8] sm:$0xf]
    %v333 = vld [vmem:[#allocation10 + $0xc] sm:$0xf]
    %v338 = vunpack.c.l.b16 %v330
    %v339 = vunpack.c.l.b16 %v331
    %v340 = vunpack.c.l.b16 %v332
    %v341 = vunpack.c.l.b16 %v333
    %v342 = vpack.c.b16 %v339, %v338
    %v343 = vpack.c.b16 %v341, %v340
    %346 = vmatpush.bf16.msra.mxu0 0
    %347 = vmatpush.bf16.msra.mxu0 0
    %348 = vmatpush.bf16.msra.mxu0 0
    %349 = vmatpush.bf16.msra.mxu0 0
    %350 = vmatpush.bf16.msra.mxu0 0
    %351 = vmatpush.bf16.msra.mxu0 0
    %352 = vmatpush.bf16.msra.mxu0 %v343
    %353 = vmatpush.bf16.msra.mxu0 %v342
    %354 = vmatmul.bf16.gmra.mxu0 %v315
    %v355 = vpop.f32.mrf.mxu0
    %v356 = vadd.f32 0.0, %v355
    %v357 = vpop.f32.mrf.mxu0
    %358 = vdwg.mxu0
    %v359 = vpack.c.bf16 %v327, %v327
    %v361 = vsel %vm313, %v359, 0
    %363 = vmatpush.bf16.xpose.msra.mxu0 0
    %364 = vmatpush.bf16.xpose.msra.mxu0 0
    %365 = vmatpush.bf16.xpose.msra.mxu0 0
    %366 = vmatpush.bf16.xpose.msra.mxu0 0
    %367 = vmatpush.bf16.xpose.msra.mxu0 0
    %368 = vmatpush.bf16.xpose.msra.mxu0 0
    %369 = vmatpush.bf16.xpose.msra.mxu0 0
    %370 = vmatpush.bf16.xpose.msra.mxu0 %v315
    %371 = vmatmul.bf16.gmra.mxu0 %v361
    %v372 = vpop.f32.mrf.mxu0
    %v373 = vadd.f32 0.0, %v372
    %v374 = vpop.f32.mrf.mxu0
    %375 = vdwg.mxu0
    %v376 = vmul.f32 %v373, 0.17677669
    %v377 = vstv %s282
    %v378 = vmul.f32 %v377, %v295
    %v379 = vsub.f32 %v376, %v378
    %v380 = vmul.f32 %v379, 0.5
    %v381 = vtanh.pop %v380
    %v382 = vadd.f32 %v381, 1.0
    %v383 = vmul.f32 %v382, 0.5
    %v384 = vmul.f32 %v381, 2.0
    %v385 = vmul.f32 %v381, %v381
    %v386 = vadd.f32 %v385, 1.0
    %v387 = vrcp.pop %v386
    %v388 = vmul.f32 %v386, %v387
    %v389 = vsub.f32 1.0, %v388
    %v390 = vmul.f32 %v387, %v389
    %v391 = vadd.f32 %v387, %v390
    %vm392 = vweird.f32 %v386
    %vm393 = vweird.f32 %v387
    %vm394 = vmor %vm392, %vm393
    %v395 = vsel %vm394, %v387, %v391
    %v396 = vand.u32 2147483647, %v386
    %vm397 = vcmp.eq.f32.partialorder %v396, 8.507059e+37
    %v398 = vand.u32 %v386, 2147483648
    %v399 = vor.u32 1.1754944e-38, %v398
    %v400 = vsel %vm397, %v399, %v395
    %v401 = vmul.f32 %v384, %v400
    %v402 = vmul.f32 %v383, %v250
    %v403 = vpack.c.bf16 %v402, %v402
    %v404 = vpack.c.bf16 %v356, %v356
    %vm405 = vcmask 64512
    %v407 = vsel %vm405, %v403, 0
    %vm409 = vcmask 1043456
    %v411 = vsel %vm409, %v404, 0
    %413 = vmatpush.bf16.msra.mxu0 0
    %414 = vmatpush.bf16.msra.mxu0 0
    %415 = vmatpush.bf16.msra.mxu0 0
    %416 = vmatpush.bf16.msra.mxu0 0
    %417 = vmatpush.bf16.msra.mxu0 0
    %418 = vmatpush.bf16.msra.mxu0 0
    %419 = vmatpush.bf16.msra.mxu0 0
    %420 = vmatpush.bf16.msra.mxu0 %v411
    %421 = vmatmul.bf16.gmra.mxu0 %v407
    %v422 = vpop.f32.mrf.mxu0
    %v423 = vadd.f32 0.0, %v422
    %v424 = vpop.f32.mrf.mxu0
    %425 = vdwg.mxu0
    %v426 = vtanh.pop %v423
    %v427 = vadd.f32 %v281, %v426
    %v428 = vmul.f32 %v401, %v250
    %v429 = vstv %s283
    %v430 = vmul.f32 %v429, %v294
    %v431 = vmul.f32 %v428, %v430
    %v433 = vsel %vm405, %v431, 0
    %435 = vmatpush.msra.mxu0 0.0
    %436 = vmatpush.msra.mxu0 0.0
    %437 = vmatpush.msra.mxu0 0.0
    %438 = vmatpush.msra.mxu0 0.0
    %439 = vmatpush.msra.mxu0 0.0
    %440 = vmatpush.msra.mxu0 0.0
    %441 = vmatpush.msra.mxu0 0.0
    %442 = vmatpush.msra.mxu0 0.0
    %443 = vmatpush.msra.mxu0 0.0
    %444 = vmatpush.msra.mxu0 0.0
    %445 = vmatpush.msra.mxu0 0.0
    %446 = vmatpush.msra.mxu0 0.0
    %447 = vmatpush.msra.mxu0 0.0
    %448 = vmatpush.msra.mxu0 0.0
    %449 = vmatpush.msra.mxu0 0.0
    %450 = vmatpush.msra.mxu0 %v163
    %451 = vmatmul.f32.gmra.mxu0 %v433
    %v452 = vpop.f32.mrf.mxu0
    %v453 = vadd.f32 0.0, %v452
    %454 = vdwg.mxu0
    %456 = vset.pattern.permute.xlu0 3
    %457 = vperm.xlu0 %456, %v453
    %v458 = vpop.permute.xlu0 %457
    %v460 = vmul.f32 %v458, %v163
    %v461 = vsub.f32 %v453, %v460
    %463 = vset.pattern.permute.xlu0 0
    %464 = vperm.xlu0 %463, %v461
    %v465 = vpop.permute.xlu0 %464
    %v467 = vmul.f32 %v465, %v122
    %468 = vset.pattern.permute.xlu0 1
    %469 = vperm.xlu0 %468, %v461
    %v470 = vpop.permute.xlu0 %469
    %v472 = vmul.f32 %v470, %v122
    %474 = vrot.lane.b32.xlu0 %v472, 125
    %v475 = vpop.permute.xlu0 %474
    %v477 = vadd.f32 %v467, %v475
    %478 = vset.pattern.permute.xlu0 2
    %479 = vperm.xlu0 %478, %v461
    %v480 = vpop.permute.xlu0 %479
    %v482 = vmul.f32 %v480, %v122
    %484 = vrot.lane.b32.xlu0 %v482, 122
    %v485 = vpop.permute.xlu0 %484
    %v487 = vadd.f32 %v477, %v485
    %v488 = vadd.f32 %v135, %v487
    %489 = vst.msk [vmem:[%s14] sm:$0xff] %vm162, %v488
    %491 = vset.pattern.permute.xlu0 0
    %492 = vperm.xlu0 %491, %v488
    %v493 = vpop.permute.xlu0 %492
    %v495 = vmul.f32 %v493, %v121
    %496 = vset.pattern.permute.xlu0 1
    %497 = vperm.xlu0 %496, %v488
    %v498 = vpop.permute.xlu0 %497
    %v500 = vmul.f32 %v498, %v121
    %502 = vrot.lane.b32.xlu0 %v500, 125
    %v503 = vpop.permute.xlu0 %502
    %v505 = vadd.f32 %v495, %v503
    %506 = vset.pattern.permute.xlu0 2
    %507 = vperm.xlu0 %506, %v488
    %v508 = vpop.permute.xlu0 %507
    %v510 = vmul.f32 %v508, %v121
    %512 = vrot.lane.b32.xlu0 %v510, 122
    %v513 = vpop.permute.xlu0 %512
    %v515 = vadd.f32 %v505, %v513
    %v516 = vsel %vm162, %v515, 1.0
    %v518 = vsel %vm164, %v516, 0
    %520 = vmatpush.xpose.msra.mxu0 0.0
    %521 = vmatpush.xpose.msra.mxu0 0.0
    %522 = vmatpush.xpose.msra.mxu0 0.0
    %523 = vmatpush.xpose.msra.mxu0 0.0
    %524 = vmatpush.xpose.msra.mxu0 0.0
    %525 = vmatpush.xpose.msra.mxu0 0.0
    %526 = vmatpush.xpose.msra.mxu0 0.0
    %527 = vmatpush.xpose.msra.mxu0 0.0
    %528 = vmatpush.xpose.msra.mxu0 0.0
    %529 = vmatpush.xpose.msra.mxu0 0.0
    %530 = vmatpush.xpose.msra.mxu0 0.0
    %531 = vmatpush.xpose.msra.mxu0 0.0
    %532 = vmatpush.xpose.msra.mxu0 0.0
    %533 = vmatpush.xpose.msra.mxu0 0.0
    %534 = vmatpush.xpose.msra.mxu0 0.0
    %535 = vmatpush.xpose.msra.mxu0 %v518
    %536 = vmatmul.f32.gmra.mxu0 %v518
    %v537 = vpop.f32.mrf.mxu0
    %v538 = vadd.f32 0.0, %v537
    %539 = vdwg.mxu0
    %v540 = vmul.f32 %v516, %v516
    %542 = vrot.lane.b32.xlu0 %v540, 127
    %v543 = vpop.permute.xlu0 %542
    %v545 = vadd.f32 %v540, %v543
    %546 = vrot.lane.b32.xlu0 %v540, 126
    %v547 = vpop.permute.xlu0 %546
    %v549 = vadd.f32 %v545, %v547
    %550 = vxpose.xlu0.b32.start [1/16] %v549, 128
    %551 = vxpose.xlu0.b32.cont [2/16] 0.0, 128
    %552 = vxpose.xlu0.b32.cont [3/16] 0.0, 128
    %553 = vxpose.xlu0.b32.cont [4/16] 0.0, 128
    %554 = vxpose.xlu0.b32.cont [5/16] 0.0, 128
    %555 = vxpose.xlu0.b32.cont [6/16] 0.0, 128
    %556 = vxpose.xlu0.b32.cont [7/16] 0.0, 128
    %557 = vxpose.xlu0.b32.cont [8/16] 0.0, 128
    %558 = vxpose.xlu0.b32.cont [9/16] 0.0, 128
    %559 = vxpose.xlu0.b32.cont [10/16] 0.0, 128
    %560 = vxpose.xlu0.b32.cont [11/16] 0.0, 128
    %561 = vxpose.xlu0.b32.cont [12/16] 0.0, 128
    %562 = vxpose.xlu0.b32.cont [13/16] 0.0, 128
    %563 = vxpose.xlu0.b32.cont [14/16] 0.0, 128
    %564 = vxpose.xlu0.b32.cont [15/16] 0.0, 128
    %565 = vxpose.xlu0.b32.end [16/16] 0.0, 128
    %v566 = vpop.trf.xlu0
    %v567 = vpop.trf.xlu0
    %v568 = vpop.trf.xlu0
    %v569 = vpop.trf.xlu0
    %v570 = vpop.trf.xlu0
    %v571 = vpop.trf.xlu0
    %v572 = vpop.trf.xlu0
    %v573 = vpop.trf.xlu0
    %v574 = vpop.trf.xlu0
    %v575 = vpop.trf.xlu0
    %v576 = vpop.trf.xlu0
    %v577 = vpop.trf.xlu0
    %v578 = vpop.trf.xlu0
    %v579 = vpop.trf.xlu0
    %v580 = vpop.trf.xlu0
    %v581 = vpop.trf.xlu0
    %583 = vset.pattern.permute.xlu0 0
    %584 = vperm.xlu0 %583, %v549
    %v585 = vpop.permute.xlu0 %584
    %v587 = vperm.slane %v566, 0
    %v588 = vadd.f32 %v585, %v587
    %v589 = vsub.f32 %v538, 1.0
    %v590 = vmul.f32 %v589, 2.0
    %v591 = vsub.f32 %v588, %v590
    %v592 = vmax.f32 %v591, 0.0
    %s593 = sld [smem:[#allocation2 + $0x2]]
    %s594 = sld [smem:[#allocation2 + $0x3]]
    %v595 = vadd.f32 %v592, 1e-06
    %v596 = vrsqrt.pop %v595
    %v597 = vmul.f32 %v596, %v595
    %v598 = vmul.f32 %v597, %v596
    %v599 = vmul.f32 0.5, %v598
    %v600 = vsub.f32 1.5, %v599
    %v601 = vmul.f32 %v596, %v600
    %vm602 = vweird.f32 %v595
    %vm603 = vweird.f32 %v596
    %vm604 = vmor %vm602, %vm603
    %v605 = vsel %vm604, %v596, %v601
    %v606 = vmul.f32 %v592, %v605
    %v607 = vpack.c.bf16 %v427, %v427
    %s608 = scalar_lea.vmem %s10, 16
    %v609 = vld [vmem:[%s608] sm:$0xf]
    %v610 = vld [vmem:[%s608 + $0x4] sm:$0xf]
    %v611 = vld [vmem:[%s608 + $0x8] sm:$0xf]
    %v612 = vld [vmem:[%s608 + $0xc] sm:$0xf]
    %v617 = vunpack.c.l.b16 %v609
    %v618 = vunpack.c.l.b16 %v610
    %v619 = vunpack.c.l.b16 %v611
    %v620 = vunpack.c.l.b16 %v612
    %v621 = vpack.c.b16 %v618, %v617
    %v622 = vpack.c.b16 %v620, %v619
    %v626 = vsel %vm313, %v607, 0
    %628 = vmatpush.bf16.msra.mxu0 0
    %629 = vmatpush.bf16.msra.mxu0 0
    %630 = vmatpush.bf16.msra.mxu0 0
    %631 = vmatpush.bf16.msra.mxu0 0
    %632 = vmatpush.bf16.msra.mxu0 0
    %633 = vmatpush.bf16.msra.mxu0 0
    %634 = vmatpush.bf16.msra.mxu0 %v622
    %635 = vmatpush.bf16.msra.mxu0 %v621
    %636 = vmatmul.bf16.gmra.mxu0 %v626
    %v637 = vpop.f32.mrf.mxu0
    %v638 = vadd.f32 0.0, %v637
    %v639 = vpop.f32.mrf.mxu0
    %640 = vdwg.mxu0
    %s641 = scalar_lea.vmem [#allocation10], 16
    %v642 = vld [vmem:[%s641] sm:$0xf]
    %v643 = vld [vmem:[%s641 + $0x4] sm:$0xf]
    %v644 = vld [vmem:[%s641 + $0x8] sm:$0xf]
    %v645 = vld [vmem:[%s641 + $0xc] sm:$0xf]
    %v650 = vunpack.c.l.b16 %v642
    %v651 = vunpack.c.l.b16 %v643
    %v652 = vunpack.c.l.b16 %v644
    %v653 = vunpack.c.l.b16 %v645
    %v654 = vpack.c.b16 %v651, %v650
    %v655 = vpack.c.b16 %v653, %v652
    %658 = vmatpush.bf16.msra.mxu0 0
    %659 = vmatpush.bf16.msra.mxu0 0
    %660 = vmatpush.bf16.msra.mxu0 0
    %661 = vmatpush.bf16.msra.mxu0 0
    %662 = vmatpush.bf16.msra.mxu0 0
    %663 = vmatpush.bf16.msra.mxu0 0
    %664 = vmatpush.bf16.msra.mxu0 %v655
    %665 = vmatpush.bf16.msra.mxu0 %v654
    %666 = vmatmul.bf16.gmra.mxu0 %v626
    %v667 = vpop.f32.mrf.mxu0
    %v668 = vadd.f32 0.0, %v667
    %v669 = vpop.f32.mrf.mxu0
    %670 = vdwg.mxu0
    %v671 = vpack.c.bf16 %v638, %v638
    %v673 = vsel %vm313, %v671, 0
    %675 = vmatpush.bf16.xpose.msra.mxu0 0
    %676 = vmatpush.bf16.xpose.msra.mxu0 0
    %677 = vmatpush.bf16.xpose.msra.mxu0 0
    %678 = vmatpush.bf16.xpose.msra.mxu0 0
    %679 = vmatpush.bf16.xpose.msra.mxu0 0
    %680 = vmatpush.bf16.xpose.msra.mxu0 0
    %681 = vmatpush.bf16.xpose.msra.mxu0 0
    %682 = vmatpush.bf16.xpose.msra.mxu0 %v626
    %683 = vmatmul.bf16.gmra.mxu0 %v673
    %v684 = vpop.f32.mrf.mxu0
    %v685 = vadd.f32 0.0, %v684
    %v686 = vpop.f32.mrf.mxu0
    %687 = vdwg.mxu0
    %v688 = vmul.f32 %v685, 0.17677669
    %v689 = vstv %s593
    %v690 = vmul.f32 %v689, %v606
    %v691 = vsub.f32 %v688, %v690
    %v692 = vmul.f32 %v691, 0.5
    %v693 = vtanh.pop %v692
    %v694 = vadd.f32 %v693, 1.0
    %v695 = vmul.f32 %v694, 0.5
    %v696 = vmul.f32 %v693, 2.0
    %v697 = vmul.f32 %v693, %v693
    %v698 = vadd.f32 %v697, 1.0
    %v699 = vrcp.pop %v698
    %v700 = vmul.f32 %v698, %v699
    %v701 = vsub.f32 1.0, %v700
    %v702 = vmul.f32 %v699, %v701
    %v703 = vadd.f32 %v699, %v702
    %vm704 = vweird.f32 %v698
    %vm705 = vweird.f32 %v699
    %vm706 = vmor %vm704, %vm705
    %v707 = vsel %vm706, %v699, %v703
    %v708 = vand.u32 2147483647, %v698
    %vm709 = vcmp.eq.f32.partialorder %v708, 8.507059e+37
    %v710 = vand.u32 %v698, 2147483648
    %v711 = vor.u32 1.1754944e-38, %v710
    %v712 = vsel %vm709, %v711, %v707
    %v713 = vmul.f32 %v696, %v712
    %v714 = vmul.f32 %v695, %v250
    %v715 = vpack.c.bf16 %v714, %v714
    %v716 = vpack.c.bf16 %v668, %v668
    %v718 = vsel %vm405, %v715, 0
    %v721 = vsel %vm409, %v716, 0
    %723 = vmatpush.bf16.msra.mxu0 0
    %724 = vmatpush.bf16.msra.mxu0 0
    %725 = vmatpush.bf16.msra.mxu0 0
    %726 = vmatpush.bf16.msra.mxu0 0
    %727 = vmatpush.bf16.msra.mxu0 0
    %728 = vmatpush.bf16.msra.mxu0 0
    %729 = vmatpush.bf16.msra.mxu0 0
    %730 = vmatpush.bf16.msra.mxu0 %v721
    %731 = vmatmul.bf16.gmra.mxu0 %v718
    %v732 = vpop.f32.mrf.mxu0
    %v733 = vadd.f32 0.0, %v732
    %v734 = vpop.f32.mrf.mxu0
    %735 = vdwg.mxu0
    %v736 = vtanh.pop %v733
    %v737 = vadd.f32 %v427, %v736
    %v738 = vmul.f32 %v713, %v250
    %v739 = vstv %s594
    %v740 = vmul.f32 %v739, %v605
    %v741 = vmul.f32 %v738, %v740
    %v743 = vsel %vm405, %v741, 0
    %745 = vmatpush.msra.mxu0 0.0
    %746 = vmatpush.msra.mxu0 0.0
    %747 = vmatpush.msra.mxu0 0.0
    %748 = vmatpush.msra.mxu0 0.0
    %749 = vmatpush.msra.mxu0 0.0
    %750 = vmatpush.msra.mxu0 0.0
    %751 = vmatpush.msra.mxu0 0.0
    %752 = vmatpush.msra.mxu0 0.0
    %753 = vmatpush.msra.mxu0 0.0
    %754 = vmatpush.msra.mxu0 0.0
    %755 = vmatpush.msra.mxu0 0.0
    %756 = vmatpush.msra.mxu0 0.0
    %757 = vmatpush.msra.mxu0 0.0
    %758 = vmatpush.msra.mxu0 0.0
    %759 = vmatpush.msra.mxu0 0.0
    %760 = vmatpush.msra.mxu0 %v516
    %761 = vmatmul.f32.gmra.mxu0 %v743
    %v762 = vpop.f32.mrf.mxu0
    %v763 = vadd.f32 0.0, %v762
    %764 = vdwg.mxu0
    %766 = vset.pattern.permute.xlu0 3
    %767 = vperm.xlu0 %766, %v763
    %v768 = vpop.permute.xlu0 %767
    %v770 = vmul.f32 %v768, %v516
    %v771 = vsub.f32 %v763, %v770
    %773 = vset.pattern.permute.xlu0 0
    %774 = vperm.xlu0 %773, %v771
    %v775 = vpop.permute.xlu0 %774
    %v777 = vmul.f32 %v775, %v122
    %778 = vset.pattern.permute.xlu0 1
    %779 = vperm.xlu0 %778, %v771
    %v780 = vpop.permute.xlu0 %779
    %v782 = vmul.f32 %v780, %v122
    %784 = vrot.lane.b32.xlu0 %v782, 125
    %v785 = vpop.permute.xlu0 %784
    %v787 = vadd.f32 %v777, %v785
    %788 = vset.pattern.permute.xlu0 2
    %789 = vperm.xlu0 %788, %v771
    %v790 = vpop.permute.xlu0 %789
    %v792 = vmul.f32 %v790, %v122
    %794 = vrot.lane.b32.xlu0 %v792, 122
    %v795 = vpop.permute.xlu0 %794
    %v797 = vadd.f32 %v787, %v795
    %v798 = vadd.f32 %v488, %v797
    %s799 = scalar_lea.vmem %s14, 8
    %800 = vst.msk [vmem:[%s799] sm:$0xff] %vm162, %v798
    %vm801 = vcmp.eq.s32.totalorder %v131, %v128
    %v802 = vsel %vm801, 1.0, 0.0
    %v803 = vpack.c.bf16 %v802, %v802
    %v804 = vpack.c.bf16 %v737, %v737
    %v806 = vsel %vm405, %v803, 0
    %v809 = vsel %vm409, %v804, 0
    %811 = vmatpush.bf16.msra.mxu0 0
    %812 = vmatpush.bf16.msra.mxu0 0
    %813 = vmatpush.bf16.msra.mxu0 0
    %814 = vmatpush.bf16.msra.mxu0 0
    %815 = vmatpush.bf16.msra.mxu0 0
    %816 = vmatpush.bf16.msra.mxu0 0
    %817 = vmatpush.bf16.msra.mxu0 0
    %818 = vmatpush.bf16.msra.mxu0 %v809
    %819 = vmatmul.bf16.gmra.mxu0 %v806
    %v820 = vpop.f32.mrf.mxu0
    %v821 = vadd.f32 0.0, %v820
    %v822 = vpop.f32.mrf.mxu0
    %823 = vdwg.mxu0
    %v824 = vpack.c.bf16 %v821, %v821
    %v825 = vld [vmem:[%s12] sm:$0xf]
    %v826 = vld [vmem:[%s12 + $0x4] sm:$0xf]
    %v827 = vld [vmem:[%s12 + $0x8] sm:$0xf]
    %v828 = vld [vmem:[%s12 + $0xc] sm:$0xf]
    %v829 = vld [vmem:[%s13] sm:$0x1]
    %v831 = vperm.slane %v829, 0
    %v837 = vunpack.c.l.b16 %v825
    %v838 = vunpack.c.l.b16 %v826
    %v839 = vunpack.c.l.b16 %v827
    %v840 = vunpack.c.l.b16 %v828
    %v841 = vpack.c.b16 %v838, %v837
    %v842 = vpack.c.b16 %v840, %v839
    %v846 = vsel %vm313, %v824, 0
    %848 = vmatpush.bf16.msra.mxu0 0
    %849 = vmatpush.bf16.msra.mxu0 0
    %850 = vmatpush.bf16.msra.mxu0 0
    %851 = vmatpush.bf16.msra.mxu0 0
    %852 = vmatpush.bf16.msra.mxu0 0
    %853 = vmatpush.bf16.msra.mxu0 0
    %854 = vmatpush.bf16.msra.mxu0 %v842
    %855 = vmatpush.bf16.msra.mxu0 %v841
    %856 = vmatmul.bf16.gmra.mxu0 %v846
    %v857 = vpop.f32.mrf.mxu0
    %v858 = vadd.f32 %v831, %v857
    %v859 = vpop.f32.mrf.mxu0
    %860 = vdwg.mxu0
    %v861 = vtanh.pop %v858
    %vm862 = vcmask 66560
    %863 = vst.msk [vmem:[#allocation12] sm:$0x3] %vm862, %v861
    // Predicated region
    $region78: #{tpu_custom_call.1} parent=1 // pred_check
      _
    $region79: #{tpu_custom_call.1} parent=1 // pred_check_branch
      %865 = sbr.rel (0) target = $region81
    $region80: #{tpu_custom_call.1} parent=1 // pred_region
      _
    $region81: #{tpu_custom_call.1} parent=1 // pred_fallthru
      _
    // Predicated region
    $region82: #{tpu_custom_call.1} parent=1 // pred_check
      _
    $region83: #{tpu_custom_call.1} parent=1 // pred_check_branch
      %867 = sbr.rel (0) target = $region85
    $region84: #{tpu_custom_call.1} parent=1 // pred_region
      %869 = vsyncadd [#allocation4], 0
      %s871 = sshll.u32 [#allocation12], 4
      %s872 = int_to_ptr.vmem [resolvable:$true] %s871
      %s873 = sshll.u32 %s15, 4
      %s874 = int_to_ptr.hbm [resolvable:$true] %s873
      %876 = dma.vmem_to_hbm [thread:$0]  %s872, 32, %s874, [#allocation4]
    $region85: #{tpu_custom_call.1} parent=1 // pred_fallthru
      _
    // Predicated region
    $region86: #{tpu_custom_call.1} parent=1 // pred_check
      _
    $region87: #{tpu_custom_call.1} parent=1 // pred_check_branch
      %878 = sbr.rel (0) target = $region89
    $region88: #{tpu_custom_call.1} parent=1 // pred_region
      _
    $region89: #{tpu_custom_call.1} parent=1 // pred_fallthru
      _
    // Predicated region
    $region90: #{tpu_custom_call.1} parent=1 // pred_check
      _
    $region91: #{tpu_custom_call.1} parent=1 // pred_check_branch
      %880 = sbr.rel (0) target = $region93
    $region92: #{tpu_custom_call.1} parent=1 // pred_region
      %882 = dma.done [#allocation4], 32
    $region93: #{tpu_custom_call.1} parent=1 // pred_fallthru
      _
    %883 = vsyncpa [#allocation3], 1
    %884 = vsyncpa [#allocation8], 1
    %885 = vsyncpa [#allocation11], 1
    %886 = vsyncpa [#allocation4], 1
    %887 = vsyncpa [#allocation5], 1

</llo_original>
